<compile_context>
chip_gen: v5e
topology: v5e:2x2
jax: 0.10.0
libtpu: 0.0.40
codegen_flags: <defaults>
</compile_context>

<pallas_src>
import functools

import jax
import jax.numpy as jnp
from jax.experimental import pallas as pl
from jax.experimental.pallas import tpu as pltpu

C_IN = 3      # the module hardcodes Conv1d(3, 3, kernel_size=5)
K = 5
PAD = K // 2  # padding='same' with stride 1 -> 2 zeros each side


def _tda_kernel(b_ref, a_ref, x_ref, o_ref, *, tn, c, block, hw):
    """One grid step: full TimeDomainAttention on a (tn, c, block, hw) tile.

    b_ref: (c,) SMEM                  conv1d bias
    a_ref: (c, c, block, block) VMEM  banded conv matrices (1/HW pre-folded)
    x_ref: (tn, c, block, hw) VMEM    input tile (native dtype)
    o_ref: (tn, c, block, hw) VMEM    output tile
    """
    # Per-input-channel spatial sums; the mean's 1/HW is folded into a_ref.
    # Shape (tn, 1, block): Block sits on the lane axis here.
    pooled = [
        jnp.sum(x_ref[:, ci:ci + 1, :, :].astype(jnp.float32), axis=-1)
        for ci in range(c)
    ]

    for co in range(c):
        # Conv1d(C->C, K, padding='same') on the VPU/XLU: broadcast-multiply the
        # pooled signal against the banded weight matrix and lane-reduce over
        # the input time index. Result (tn, block, 1): output time index lands
        # on the sublane axis, ready to broadcast against the (block, hw) tile.
        acc = jnp.zeros((tn, block, 1), jnp.float32) + b_ref[co]
        for ci in range(c):
            acc = acc + jnp.sum(pooled[ci] * a_ref[co, ci],
                                axis=-1, keepdims=True)
        # sigmoid(acc) + 1  (manual formula keeps the lowering to exp + div)
        m = 1.0 / (1.0 + jnp.exp(-acc)) + 1.0                 # (tn, block, 1)
        o_ref[:, co, :, :] = (
            x_ref[:, co, :, :].astype(jnp.float32) * m
        ).astype(o_ref.dtype)


def _banded_conv_matrices(conv_w, block, hw):
    """A[co, ci, b_out, b_in] = conv_w[co, ci, b_in - b_out + PAD] / hw (0 outside),
    so that  out[n, co, b_out] = sum_{ci, b_in} spatial_sum(x)[n, ci, b_in] * A[...]
    reproduces Conv1d(padding='same') applied to the spatial mean."""
    b_out = jnp.arange(block)[:, None]
    b_in = jnp.arange(block)[None, :]
    k = b_in - b_out + PAD                                    # (block, block)
    valid = (k >= 0) & (k < K)
    k_c = jnp.clip(k, 0, K - 1)
    w = conv_w.astype(jnp.float32) / float(hw)                # (C, C, K)
    return jnp.where(valid[None, None], w[:, :, k_c], 0.0)    # (C, C, block, block)


def _choose_tn(n, per_n_bytes, budget_bytes=12 << 20):
    """Largest divisor of n whose double-buffered in+out tiles fit the budget,
    preferring >= 2 grid steps (keeps both v7x TensorCores busy)."""
    divisors = [d for d in range(1, n + 1) if n % d == 0]
    fits = [d for d in divisors if 4 * d * per_n_bytes <= budget_bytes] or [1]
    multi_step = [d for d in fits if n // d >= 2]
    return max(multi_step) if multi_step else max(fits)


def time_domain_attention(x, conv_w, conv_b):
    """x: (N, 3, Block, H, W) -> same shape.  conv_w: (3, 3, 5), conv_b: (3,)."""
    N, c, block, H, W = x.shape
    assert c == C_IN and conv_w.shape == (c, c, K) and conv_b.shape == (c,)
    hw = H * W
    x_r = x.reshape(N, c, block, hw)          # native dtype; cast happens in-kernel

    a_band = _banded_conv_matrices(conv_w, block, hw)          # (C, C, Block, Block)
    bias = conv_b.astype(jnp.float32)                          # (C,) -> SMEM

    per_n_bytes = c * block * hw * x_r.dtype.itemsize
    tn = _choose_tn(N, per_n_bytes)
    grid = (N // tn,)

    cost = pl.CostEstimate(
        flops=int(3 * N * c * block * hw + 2 * N * c * c * block * block),
        transcendentals=int(N * c * block),
        bytes_accessed=int(2 * N * c * block * hw * x_r.dtype.itemsize),
    )

    kernel = functools.partial(_tda_kernel, tn=tn, c=c, block=block, hw=hw)
    out = pl.pallas_call(
        kernel,
        out_shape=jax.ShapeDtypeStruct((N, c, block, hw), x_r.dtype),
        grid_spec=pltpu.PrefetchScalarGridSpec(
            num_scalar_prefetch=0,
            grid=grid,
            in_specs=[
                pl.BlockSpec(memory_space=pltpu.MemorySpace.SMEM),        # bias
                pl.BlockSpec((c, c, block, block), lambda i: (0, 0, 0, 0)),
                pl.BlockSpec((tn, c, block, hw), lambda i: (i, 0, 0, 0)),
            ],
            out_specs=pl.BlockSpec((tn, c, block, hw), lambda i: (i, 0, 0, 0)),
        ),
        compiler_params=pltpu.CompilerParams(
            dimension_semantics=("parallel",)),
        cost_estimate=cost,
    )(bias, a_band, x_r)
    return out.reshape(N, c, block, H, W)


def time_domain_attention_reference(x, conv_w, conv_b):
    """Pure-JAX reference mirroring the PyTorch forward."""
    N, c, block, H, W = x.shape
    xf = x.astype(jnp.float32)
    pooled = jnp.mean(xf, axis=(3, 4))                         # (N, C, Block)
    padded = jnp.pad(pooled, ((0, 0), (0, 0), (PAD, PAD)))
    outs = []
    for co in range(c):
        acc = jnp.zeros((N, block), jnp.float32) + conv_b[co]
        for ci in range(c):
            for k in range(K):
                acc = acc + conv_w[co, ci, k] * padded[:, ci, k:k + block]
        outs.append(acc)
    m = jax.nn.sigmoid(jnp.stack(outs, axis=1)) + 1.0          # (N, C, Block)
    return (xf * m[:, :, :, None, None]).astype(x.dtype)


if __name__ == "__main__":
    # Small shapes consistent with the module: (N, C=3, Block, H, W)
    N, c, block, H, W = 2, 3, 8, 16, 16

    key = jax.random.PRNGKey(0)
    kx, kw, kb = jax.random.split(key, 3)
    x = jax.random.normal(kx, (N, c, block, H, W), dtype=jnp.float32)
    conv_w = 0.2 * jax.random.normal(kw, (c, c, K), dtype=jnp.float32)   # Conv1d weight
    conv_b = 0.1 * jax.random.normal(kb, (c,), dtype=jnp.float32)        # Conv1d bias

    out = time_domain_attention(x, conv_w, conv_b)
    out = jax.block_until_ready(out)

    ref = time_domain_attention_reference(x, conv_w, conv_b)
    assert out.shape == x.shape, out.shape
    assert jnp.allclose(out, ref, atol=1e-5, rtol=1e-5), \
        f"max err {jnp.max(jnp.abs(out - ref))}"

    print("KERNEL_OK")
</pallas_src>

<mosaic_0001>
module attributes {stable_mosaic.version = 11 : i64} {
  func.func @_tda_kernel(%arg0: i32, %arg1: memref<3xf32, #tpu.memory_space<smem>>, %arg2: memref<3x3x8x8xf32, #tpu.memory_space<vmem>>, %arg3: memref<1x3x8x256xf32, #tpu.memory_space<vmem>>, %arg4: memref<1x3x8x256xf32, #tpu.memory_space<vmem>>) attributes {dimension_semantics = [#tpu.dimension_semantics<parallel>], iteration_bounds = array<i64: 2>, scalar_prefetch = 0 : i64, scratch_operands = 0 : i64, tpu.core_type = #tpu.core_type<tc>, window_params = [{transform_indices = @transform_0, window_bounds = array<i64: 3>}, {pipeline_mode = #tpu.pipeline_mode<synchronous>, transform_indices = @transform_1, window_bounds = array<i64: 3, 3, 8, 8>}, {transform_indices = @transform_2, window_bounds = array<i64: 1, 3, 8, 256>}, {transform_indices = @transform_3, window_bounds = array<i64: 1, 3, 8, 256>}]} {
    %c0 = arith.constant 0 : index
    %c0_0 = arith.constant 0 : index
    %c0_1 = arith.constant 0 : index
    %c0_2 = arith.constant 0 : index
    %0 = vector.load %arg3[%c0, %c0_0, %c0_1, %c0_2] : memref<1x3x8x256xf32, #tpu.memory_space<vmem>>, vector<1x1x8x256xf32>
    %cst = arith.constant dense<0.000000e+00> : vector<1x1x8xf32>
    %1 = vector.multi_reduction <add>, %0, %cst [3] : vector<1x1x8x256xf32> to vector<1x1x8xf32>
    %c0_3 = arith.constant 0 : index
    %c1 = arith.constant 1 : index
    %c0_4 = arith.constant 0 : index
    %c0_5 = arith.constant 0 : index
    %2 = vector.load %arg3[%c0_3, %c1, %c0_4, %c0_5] : memref<1x3x8x256xf32, #tpu.memory_space<vmem>>, vector<1x1x8x256xf32>
    %cst_6 = arith.constant dense<0.000000e+00> : vector<1x1x8xf32>
    %3 = vector.multi_reduction <add>, %2, %cst_6 [3] : vector<1x1x8x256xf32> to vector<1x1x8xf32>
    %c0_7 = arith.constant 0 : index
    %c2 = arith.constant 2 : index
    %c0_8 = arith.constant 0 : index
    %c0_9 = arith.constant 0 : index
    %4 = vector.load %arg3[%c0_7, %c2, %c0_8, %c0_9] : memref<1x3x8x256xf32, #tpu.memory_space<vmem>>, vector<1x1x8x256xf32>
    %cst_10 = arith.constant dense<0.000000e+00> : vector<1x1x8xf32>
    %5 = vector.multi_reduction <add>, %4, %cst_10 [3] : vector<1x1x8x256xf32> to vector<1x1x8xf32>
    %cst_11 = arith.constant 0.000000e+00 : f32
    %6 = vector.broadcast %cst_11 : f32 to vector<1x8x1xf32>
    %c0_12 = arith.constant 0 : index
    %7 = memref.load %arg1[%c0_12] : memref<3xf32, #tpu.memory_space<smem>>
    %8 = vector.broadcast %7 : f32 to vector<1x8x1xf32>
    %9 = arith.addf %6, %8 : vector<1x8x1xf32>
    %c0_13 = arith.constant 0 : index
    %c0_14 = arith.constant 0 : index
    %c0_15 = arith.constant 0 : index
    %c0_16 = arith.constant 0 : index
    %10 = vector.load %arg2[%c0_13, %c0_14, %c0_15, %c0_16] : memref<3x3x8x8xf32, #tpu.memory_space<vmem>>, vector<1x1x8x8xf32>
    %11 = vector.shape_cast %10 : vector<1x1x8x8xf32> to vector<8x8xf32>
    %12 = vector.shape_cast %11 : vector<8x8xf32> to vector<1x8x8xf32>
    %13 = vector.broadcast %1 : vector<1x1x8xf32> to vector<1x8x8xf32>
    %14 = arith.mulf %13, %12 : vector<1x8x8xf32>
    %cst_17 = arith.constant dense<0.000000e+00> : vector<1x8xf32>
    %15 = vector.multi_reduction <add>, %14, %cst_17 [2] : vector<1x8x8xf32> to vector<1x8xf32>
    %16 = vector.shape_cast %15 : vector<1x8xf32> to vector<1x8x1xf32>
    %17 = arith.addf %9, %16 : vector<1x8x1xf32>
    %c0_18 = arith.constant 0 : index
    %c1_19 = arith.constant 1 : index
    %c0_20 = arith.constant 0 : index
    %c0_21 = arith.constant 0 : index
    %18 = vector.load %arg2[%c0_18, %c1_19, %c0_20, %c0_21] : memref<3x3x8x8xf32, #tpu.memory_space<vmem>>, vector<1x1x8x8xf32>
    %19 = vector.shape_cast %18 : vector<1x1x8x8xf32> to vector<8x8xf32>
    %20 = vector.shape_cast %19 : vector<8x8xf32> to vector<1x8x8xf32>
    %21 = vector.broadcast %3 : vector<1x1x8xf32> to vector<1x8x8xf32>
    %22 = arith.mulf %21, %20 : vector<1x8x8xf32>
    %cst_22 = arith.constant dense<0.000000e+00> : vector<1x8xf32>
    %23 = vector.multi_reduction <add>, %22, %cst_22 [2] : vector<1x8x8xf32> to vector<1x8xf32>
    %24 = vector.shape_cast %23 : vector<1x8xf32> to vector<1x8x1xf32>
    %25 = arith.addf %17, %24 : vector<1x8x1xf32>
    %c0_23 = arith.constant 0 : index
    %c2_24 = arith.constant 2 : index
    %c0_25 = arith.constant 0 : index
    %c0_26 = arith.constant 0 : index
    %26 = vector.load %arg2[%c0_23, %c2_24, %c0_25, %c0_26] : memref<3x3x8x8xf32, #tpu.memory_space<vmem>>, vector<1x1x8x8xf32>
    %27 = vector.shape_cast %26 : vector<1x1x8x8xf32> to vector<8x8xf32>
    %28 = vector.shape_cast %27 : vector<8x8xf32> to vector<1x8x8xf32>
    %29 = vector.broadcast %5 : vector<1x1x8xf32> to vector<1x8x8xf32>
    %30 = arith.mulf %29, %28 : vector<1x8x8xf32>
    %cst_27 = arith.constant dense<0.000000e+00> : vector<1x8xf32>
    %31 = vector.multi_reduction <add>, %30, %cst_27 [2] : vector<1x8x8xf32> to vector<1x8xf32>
    %32 = vector.shape_cast %31 : vector<1x8xf32> to vector<1x8x1xf32>
    %33 = arith.addf %25, %32 : vector<1x8x1xf32>
    %cst_28 = arith.constant 0.000000e+00 : f32
    %34 = vector.broadcast %cst_28 : f32 to vector<1x8x1xf32>
    %35 = arith.subf %34, %33 : vector<1x8x1xf32>
    %36 = math.exp %35 : vector<1x8x1xf32>
    %cst_29 = arith.constant 1.000000e+00 : f32
    %37 = vector.broadcast %cst_29 : f32 to vector<1x8x1xf32>
    %38 = arith.addf %37, %36 : vector<1x8x1xf32>
    %cst_30 = arith.constant 1.000000e+00 : f32
    %39 = vector.broadcast %cst_30 : f32 to vector<1x8x1xf32>
    %40 = arith.divf %39, %38 : vector<1x8x1xf32>
    %cst_31 = arith.constant 1.000000e+00 : f32
    %41 = vector.broadcast %cst_31 : f32 to vector<1x8x1xf32>
    %42 = arith.addf %40, %41 : vector<1x8x1xf32>
    %c0_32 = arith.constant 0 : index
    %c0_33 = arith.constant 0 : index
    %c0_34 = arith.constant 0 : index
    %c0_35 = arith.constant 0 : index
    %43 = vector.load %arg3[%c0_32, %c0_33, %c0_34, %c0_35] : memref<1x3x8x256xf32, #tpu.memory_space<vmem>>, vector<1x1x8x256xf32>
    %44 = vector.shape_cast %43 : vector<1x1x8x256xf32> to vector<1x8x256xf32>
    %45 = vector.broadcast %42 : vector<1x8x1xf32> to vector<1x8x256xf32>
    %46 = arith.mulf %44, %45 : vector<1x8x256xf32>
    %c0_36 = arith.constant 0 : index
    %c0_37 = arith.constant 0 : index
    %c0_38 = arith.constant 0 : index
    %c0_39 = arith.constant 0 : index
    %47 = vector.load %arg4[%c0_36, %c0_37, %c0_38, %c0_39] : memref<1x3x8x256xf32, #tpu.memory_space<vmem>>, vector<1x1x8x256xf32>
    %48 = vector.shape_cast %47 : vector<1x1x8x256xf32> to vector<1x8x256xf32>
    %49 = vector.shape_cast %46 : vector<1x8x256xf32> to vector<1x1x8x256xf32>
    tpu.vector_store %arg4[%c0_36, %c0_37, %c0_38, %c0_39], %49 {strides = array<i32>} : memref<1x3x8x256xf32, #tpu.memory_space<vmem>>, vector<1x1x8x256xf32>,
    %cst_40 = arith.constant 0.000000e+00 : f32
    %50 = vector.broadcast %cst_40 : f32 to vector<1x8x1xf32>
    %c1_41 = arith.constant 1 : index
    %51 = memref.load %arg1[%c1_41] : memref<3xf32, #tpu.memory_space<smem>>
    %52 = vector.broadcast %51 : f32 to vector<1x8x1xf32>
    %53 = arith.addf %50, %52 : vector<1x8x1xf32>
    %c1_42 = arith.constant 1 : index
    %c0_43 = arith.constant 0 : index
    %c0_44 = arith.constant 0 : index
    %c0_45 = arith.constant 0 : index
    %54 = vector.load %arg2[%c1_42, %c0_43, %c0_44, %c0_45] : memref<3x3x8x8xf32, #tpu.memory_space<vmem>>, vector<1x1x8x8xf32>
    %55 = vector.shape_cast %54 : vector<1x1x8x8xf32> to vector<8x8xf32>
    %56 = vector.shape_cast %55 : vector<8x8xf32> to vector<1x8x8xf32>
    %57 = vector.broadcast %1 : vector<1x1x8xf32> to vector<1x8x8xf32>
    %58 = arith.mulf %57, %56 : vector<1x8x8xf32>
    %cst_46 = arith.constant dense<0.000000e+00> : vector<1x8xf32>
    %59 = vector.multi_reduction <add>, %58, %cst_46 [2] : vector<1x8x8xf32> to vector<1x8xf32>
    %60 = vector.shape_cast %59 : vector<1x8xf32> to vector<1x8x1xf32>
    %61 = arith.addf %53, %60 : vector<1x8x1xf32>
    %c1_47 = arith.constant 1 : index
    %c1_48 = arith.constant 1 : index
    %c0_49 = arith.constant 0 : index
    %c0_50 = arith.constant 0 : index
    %62 = vector.load %arg2[%c1_47, %c1_48, %c0_49, %c0_50] : memref<3x3x8x8xf32, #tpu.memory_space<vmem>>, vector<1x1x8x8xf32>
    %63 = vector.shape_cast %62 : vector<1x1x8x8xf32> to vector<8x8xf32>
    %64 = vector.shape_cast %63 : vector<8x8xf32> to vector<1x8x8xf32>
    %65 = vector.broadcast %3 : vector<1x1x8xf32> to vector<1x8x8xf32>
    %66 = arith.mulf %65, %64 : vector<1x8x8xf32>
    %cst_51 = arith.constant dense<0.000000e+00> : vector<1x8xf32>
    %67 = vector.multi_reduction <add>, %66, %cst_51 [2] : vector<1x8x8xf32> to vector<1x8xf32>
    %68 = vector.shape_cast %67 : vector<1x8xf32> to vector<1x8x1xf32>
    %69 = arith.addf %61, %68 : vector<1x8x1xf32>
    %c1_52 = arith.constant 1 : index
    %c2_53 = arith.constant 2 : index
    %c0_54 = arith.constant 0 : index
    %c0_55 = arith.constant 0 : index
    %70 = vector.load %arg2[%c1_52, %c2_53, %c0_54, %c0_55] : memref<3x3x8x8xf32, #tpu.memory_space<vmem>>, vector<1x1x8x8xf32>
    %71 = vector.shape_cast %70 : vector<1x1x8x8xf32> to vector<8x8xf32>
    %72 = vector.shape_cast %71 : vector<8x8xf32> to vector<1x8x8xf32>
    %73 = vector.broadcast %5 : vector<1x1x8xf32> to vector<1x8x8xf32>
    %74 = arith.mulf %73, %72 : vector<1x8x8xf32>
    %cst_56 = arith.constant dense<0.000000e+00> : vector<1x8xf32>
    %75 = vector.multi_reduction <add>, %74, %cst_56 [2] : vector<1x8x8xf32> to vector<1x8xf32>
    %76 = vector.shape_cast %75 : vector<1x8xf32> to vector<1x8x1xf32>
    %77 = arith.addf %69, %76 : vector<1x8x1xf32>
    %cst_57 = arith.constant 0.000000e+00 : f32
    %78 = vector.broadcast %cst_57 : f32 to vector<1x8x1xf32>
    %79 = arith.subf %78, %77 : vector<1x8x1xf32>
    %80 = math.exp %79 : vector<1x8x1xf32>
    %cst_58 = arith.constant 1.000000e+00 : f32
    %81 = vector.broadcast %cst_58 : f32 to vector<1x8x1xf32>
    %82 = arith.addf %81, %80 : vector<1x8x1xf32>
    %cst_59 = arith.constant 1.000000e+00 : f32
    %83 = vector.broadcast %cst_59 : f32 to vector<1x8x1xf32>
    %84 = arith.divf %83, %82 : vector<1x8x1xf32>
    %cst_60 = arith.constant 1.000000e+00 : f32
    %85 = vector.broadcast %cst_60 : f32 to vector<1x8x1xf32>
    %86 = arith.addf %84, %85 : vector<1x8x1xf32>
    %c0_61 = arith.constant 0 : index
    %c1_62 = arith.constant 1 : index
    %c0_63 = arith.constant 0 : index
    %c0_64 = arith.constant 0 : index
    %87 = vector.load %arg3[%c0_61, %c1_62, %c0_63, %c0_64] : memref<1x3x8x256xf32, #tpu.memory_space<vmem>>, vector<1x1x8x256xf32>
    %88 = vector.shape_cast %87 : vector<1x1x8x256xf32> to vector<1x8x256xf32>
    %89 = vector.broadcast %86 : vector<1x8x1xf32> to vector<1x8x256xf32>
    %90 = arith.mulf %88, %89 : vector<1x8x256xf32>
    %c0_65 = arith.constant 0 : index
    %c1_66 = arith.constant 1 : index
    %c0_67 = arith.constant 0 : index
    %c0_68 = arith.constant 0 : index
    %91 = vector.load %arg4[%c0_65, %c1_66, %c0_67, %c0_68] : memref<1x3x8x256xf32, #tpu.memory_space<vmem>>, vector<1x1x8x256xf32>
    %92 = vector.shape_cast %91 : vector<1x1x8x256xf32> to vector<1x8x256xf32>
    %93 = vector.shape_cast %90 : vector<1x8x256xf32> to vector<1x1x8x256xf32>
    tpu.vector_store %arg4[%c0_65, %c1_66, %c0_67, %c0_68], %93 {strides = array<i32>} : memref<1x3x8x256xf32, #tpu.memory_space<vmem>>, vector<1x1x8x256xf32>,
    %cst_69 = arith.constant 0.000000e+00 : f32
    %94 = vector.broadcast %cst_69 : f32 to vector<1x8x1xf32>
    %c2_70 = arith.constant 2 : index
    %95 = memref.load %arg1[%c2_70] : memref<3xf32, #tpu.memory_space<smem>>
    %96 = vector.broadcast %95 : f32 to vector<1x8x1xf32>
    %97 = arith.addf %94, %96 : vector<1x8x1xf32>
    %c2_71 = arith.constant 2 : index
    %c0_72 = arith.constant 0 : index
    %c0_73 = arith.constant 0 : index
    %c0_74 = arith.constant 0 : index
    %98 = vector.load %arg2[%c2_71, %c0_72, %c0_73, %c0_74] : memref<3x3x8x8xf32, #tpu.memory_space<vmem>>, vector<1x1x8x8xf32>
    %99 = vector.shape_cast %98 : vector<1x1x8x8xf32> to vector<8x8xf32>
    %100 = vector.shape_cast %99 : vector<8x8xf32> to vector<1x8x8xf32>
    %101 = vector.broadcast %1 : vector<1x1x8xf32> to vector<1x8x8xf32>
    %102 = arith.mulf %101, %100 : vector<1x8x8xf32>
    %cst_75 = arith.constant dense<0.000000e+00> : vector<1x8xf32>
    %103 = vector.multi_reduction <add>, %102, %cst_75 [2] : vector<1x8x8xf32> to vector<1x8xf32>
    %104 = vector.shape_cast %103 : vector<1x8xf32> to vector<1x8x1xf32>
    %105 = arith.addf %97, %104 : vector<1x8x1xf32>
    %c2_76 = arith.constant 2 : index
    %c1_77 = arith.constant 1 : index
    %c0_78 = arith.constant 0 : index
    %c0_79 = arith.constant 0 : index
    %106 = vector.load %arg2[%c2_76, %c1_77, %c0_78, %c0_79] : memref<3x3x8x8xf32, #tpu.memory_space<vmem>>, vector<1x1x8x8xf32>
    %107 = vector.shape_cast %106 : vector<1x1x8x8xf32> to vector<8x8xf32>
    %108 = vector.shape_cast %107 : vector<8x8xf32> to vector<1x8x8xf32>
    %109 = vector.broadcast %3 : vector<1x1x8xf32> to vector<1x8x8xf32>
    %110 = arith.mulf %109, %108 : vector<1x8x8xf32>
    %cst_80 = arith.constant dense<0.000000e+00> : vector<1x8xf32>
    %111 = vector.multi_reduction <add>, %110, %cst_80 [2] : vector<1x8x8xf32> to vector<1x8xf32>
    %112 = vector.shape_cast %111 : vector<1x8xf32> to vector<1x8x1xf32>
    %113 = arith.addf %105, %112 : vector<1x8x1xf32>
    %c2_81 = arith.constant 2 : index
    %c2_82 = arith.constant 2 : index
    %c0_83 = arith.constant 0 : index
    %c0_84 = arith.constant 0 : index
    %114 = vector.load %arg2[%c2_81, %c2_82, %c0_83, %c0_84] : memref<3x3x8x8xf32, #tpu.memory_space<vmem>>, vector<1x1x8x8xf32>
    %115 = vector.shape_cast %114 : vector<1x1x8x8xf32> to vector<8x8xf32>
    %116 = vector.shape_cast %115 : vector<8x8xf32> to vector<1x8x8xf32>
    %117 = vector.broadcast %5 : vector<1x1x8xf32> to vector<1x8x8xf32>
    %118 = arith.mulf %117, %116 : vector<1x8x8xf32>
    %cst_85 = arith.constant dense<0.000000e+00> : vector<1x8xf32>
    %119 = vector.multi_reduction <add>, %118, %cst_85 [2] : vector<1x8x8xf32> to vector<1x8xf32>
    %120 = vector.shape_cast %119 : vector<1x8xf32> to vector<1x8x1xf32>
    %121 = arith.addf %113, %120 : vector<1x8x1xf32>
    %cst_86 = arith.constant 0.000000e+00 : f32
    %122 = vector.broadcast %cst_86 : f32 to vector<1x8x1xf32>
    %123 = arith.subf %122, %121 : vector<1x8x1xf32>
    %124 = math.exp %123 : vector<1x8x1xf32>
    %cst_87 = arith.constant 1.000000e+00 : f32
    %125 = vector.broadcast %cst_87 : f32 to vector<1x8x1xf32>
    %126 = arith.addf %125, %124 : vector<1x8x1xf32>
    %cst_88 = arith.constant 1.000000e+00 : f32
    %127 = vector.broadcast %cst_88 : f32 to vector<1x8x1xf32>
    %128 = arith.divf %127, %126 : vector<1x8x1xf32>
    %cst_89 = arith.constant 1.000000e+00 : f32
    %129 = vector.broadcast %cst_89 : f32 to vector<1x8x1xf32>
    %130 = arith.addf %128, %129 : vector<1x8x1xf32>
    %c0_90 = arith.constant 0 : index
    %c2_91 = arith.constant 2 : index
    %c0_92 = arith.constant 0 : index
    %c0_93 = arith.constant 0 : index
    %131 = vector.load %arg3[%c0_90, %c2_91, %c0_92, %c0_93] : memref<1x3x8x256xf32, #tpu.memory_space<vmem>>, vector<1x1x8x256xf32>
    %132 = vector.shape_cast %131 : vector<1x1x8x256xf32> to vector<1x8x256xf32>
    %133 = vector.broadcast %130 : vector<1x8x1xf32> to vector<1x8x256xf32>
    %134 = arith.mulf %132, %133 : vector<1x8x256xf32>
    %c0_94 = arith.constant 0 : index
    %c2_95 = arith.constant 2 : index
    %c0_96 = arith.constant 0 : index
    %c0_97 = arith.constant 0 : index
    %135 = vector.load %arg4[%c0_94, %c2_95, %c0_96, %c0_97] : memref<1x3x8x256xf32, #tpu.memory_space<vmem>>, vector<1x1x8x256xf32>
    %136 = vector.shape_cast %135 : vector<1x1x8x256xf32> to vector<1x8x256xf32>
    %137 = vector.shape_cast %134 : vector<1x8x256xf32> to vector<1x1x8x256xf32>
    tpu.vector_store %arg4[%c0_94, %c2_95, %c0_96, %c0_97], %137 {strides = array<i32>} : memref<1x3x8x256xf32, #tpu.memory_space<vmem>>, vector<1x1x8x256xf32>,
    return
  }
  func.func @transform_0(%arg0: i32) -> i32 {
    %c0_i32 = arith.constant 0 : i32
    %c0_i32_0 = arith.constant 0 : i32
    return %c0_i32 : i32
  }
  func.func @transform_1(%arg0: i32) -> (i32, i32, i32, i32) {
    %c0_i32 = arith.constant 0 : i32
    %c0_i32_0 = arith.constant 0 : i32
    %c0_i32_1 = arith.constant 0 : i32
    %c0_i32_2 = arith.constant 0 : i32
    %c0_i32_3 = arith.constant 0 : i32
    return %c0_i32, %c0_i32_0, %c0_i32_1, %c0_i32_2 : i32, i32, i32, i32
  }
  func.func @transform_2(%arg0: i32) -> (i32, i32, i32, i32) {
    %c0_i32 = arith.constant 0 : i32
    %c0_i32_0 = arith.constant 0 : i32
    %c0_i32_1 = arith.constant 0 : i32
    %c0_i32_2 = arith.constant 0 : i32
    return %arg0, %c0_i32, %c0_i32_0, %c0_i32_1 : i32, i32, i32, i32
  }
  func.func @transform_3(%arg0: i32) -> (i32, i32, i32, i32) {
    %c0_i32 = arith.constant 0 : i32
    %c0_i32_0 = arith.constant 0 : i32
    %c0_i32_1 = arith.constant 0 : i32
    %c0_i32_2 = arith.constant 0 : i32
    return %arg0, %c0_i32, %c0_i32_0, %c0_i32_1 : i32, i32, i32, i32
  }
}

</mosaic_0001>

<llo_original>
// kernel: tpu_custom_call.1
$region0: #{tpu_custom_call.1}
  #allocation0 [shape = 'u32[]', space=smem, size = 0x4, offset = 0x4, fixed_abs, tag = 'smem constant byte address 0x4 - core index']
  #allocation1 [shape = 'u32[72,128]{1,0:T(1,128)}', space=vmem, size = 0x9000, scoped, tag = 'internal scratch']
  %s0 = inlined_call_operand.hbm [shape: f32[3], index: 0, kind: input, shape index: {}]
  %s1 = inlined_call_operand.hbm [shape: f32[3,3,8,8], index: 1, kind: input, shape index: {}]
  %s2 = inlined_call_operand.hbm [shape: f32[2,3,8,256], index: 2, kind: input, shape index: {}]
  %s3 = inlined_call_operand.hbm [shape: f32[2,3,8,256], index: 3, kind: output, shape index: {}]
  %s4 = sld [smem:[#allocation0]]
  $region57: #{tpu_custom_call.1} parent=0
    _
  %s6 = ssub.s32 1, %s4
  %s7 = scalar_select 0, %s6, %s4
  $region1: #{tpu_custom_call.1} parent=0
    #allocation2 [shape = 'u8[512]{0}', space=smem, size = 0x200, scoped, tag = 'input window, operand 0, single buffered']
    #allocation3 [shape = 's32[2]{0}', space=sflag, size = 0x8, scoped, tag = 'scoped memory for tpu_custom_call.1']
    #allocation4 [shape = 's32[2]{0}', space=sflag, size = 0x8, scoped, tag = 'scoped memory for tpu_custom_call.1']
    #allocation5 [shape = 's32[2]{0}', space=sflag, size = 0x8, scoped, tag = 'scoped memory for tpu_custom_call.1']
    #allocation6 [shape = 'u8[36864]{0}', space=vmem, size = 0x9000, scoped, tag = 'input window, operand 1, single buffered']
    #allocation7 [shape = 'u8[49152]{0}', space=vmem, size = 0xc000, scoped, tag = 'input window, operand 2']
    #allocation8 [shape = 's32[2]{0}', space=sflag, size = 0x8, scoped, tag = 'scoped memory for tpu_custom_call.1']
    #allocation9 [shape = 'u8[49152]{0}', space=vmem, size = 0xc000, scoped, tag = 'output window, operand 0']
    %8 = vsyncpa [#allocation5], 0
    %9 = vsyncpa [#allocation3], 0
    %10 = vsyncpa [#allocation8], 0
    %s11 = scalar_lea.sflag [#allocation8], 1
    %12 = vsyncpa %s11, 0
    %13 = vsyncpa [#allocation4], 0
    %s14 = scalar_lea.sflag [#allocation4], 1
    %15 = vsyncpa %s14, 0
    loop: start=0, step=1, limit=4
    $region2: #{tpu_custom_call.1} parent=1 // loop_pre_header
      _
    $region3: #{tpu_custom_call.1} parent=1 // loop_header
      %s17 = sphi 0, %s21
      %p18 = scmp.ge.s32.totalorder %s17, 4
      %s25 = sphi 0, %s25
      %s27 = sphi 0, %s25
      %s28 = sphi 0, %s27
      %s42 = sphi 0, %s28
      %s46 = sphi 0, %s46
      %s48 = sphi 0, %s46
      %s49 = sphi 0, %s48
      %s63 = sphi 0, %s49
      %s69 = sphi 0, %s71
      %s72 = sphi 0, %s69
      %s73 = sphi 0, %s72
      %s89 = sphi 0, %s73
      %s95 = sphi 0, %s97
      %s98 = sphi 0, %s95
      %s99 = sphi 0, %s98
      %s115 = sphi 0, %s99
    $region4: #{tpu_custom_call.1} parent=1 // loop_header_branch
      %20 = sbr.rel (%p18) target = $region8
    $region5: #{tpu_custom_call.1} parent=1 // loop_body
      %s22 = ssub.s32 %s17, 1
      %s23 = ssub.s32 %s17, 2
      %s24 = sadd.s32 %s17, 1
      %s26 = sadd.s32 %s25, 1
      %p29 = scmp.eq.s32.totalorder %s17, 1
      %p30 = scmp.ne.s32.totalorder %s25, %s27
      %p31 = scmp.eq.s32.totalorder %s17, 0
      %p32 = por %p30, %p31
      %p33 = scmp.ne.s32.totalorder %s25, %s27
      %p34 = scmp.eq.s32.totalorder %s22, 1
      %p35 = por %p33, %p34
      %p36 = scmp.ne.s32.totalorder %s27, %s28
      %p37 = scmp.eq.s32.totalorder %s22, 0
      %p38 = por %p36, %p37
      %p39 = scmp.ne.s32.totalorder %s27, %s28
      %p40 = scmp.eq.s32.totalorder %s23, 1
      %p41 = por %p39, %p40
      %p43 = scmp.ne.s32.totalorder %s28, %s42
      %p44 = scmp.eq.s32.totalorder %s23, 0
      %p45 = por %p43, %p44
      %s47 = sadd.s32 %s46, 1
      %p50 = scmp.eq.s32.totalorder %s17, 1
      %p51 = scmp.ne.s32.totalorder %s46, %s48
      %p52 = scmp.eq.s32.totalorder %s17, 0
      %p53 = por %p51, %p52
      %p54 = scmp.ne.s32.totalorder %s46, %s48
      %p55 = scmp.eq.s32.totalorder %s22, 1
      %p56 = por %p54, %p55
      %p57 = scmp.ne.s32.totalorder %s48, %s49
      %p58 = scmp.eq.s32.totalorder %s22, 0
      %p59 = por %p57, %p58
      %p60 = scmp.ne.s32.totalorder %s48, %s49
      %p61 = scmp.eq.s32.totalorder %s23, 1
      %p62 = por %p60, %p61
      %p64 = scmp.ne.s32.totalorder %s49, %s63
      %p65 = scmp.eq.s32.totalorder %s23, 0
      %p66 = por %p64, %p65
      %s67 = ssub.s32 %s17, %s24
      %p68 = scmp.eq.s32.totalorder %s67, 0
      %s70 = sadd.s32 %s69, 1
      %s71 = scalar_select %p68, %s69, %s70
      %p74 = pneg %p68
      %p75 = scmp.eq.s32.totalorder %s17, 1
      %p76 = por %p74, %p75
      %p77 = scmp.ne.s32.totalorder %s69, %s72
      %p78 = scmp.eq.s32.totalorder %s17, 0
      %p79 = por %p77, %p78
      %p80 = scmp.ne.s32.totalorder %s69, %s72
      %p81 = scmp.eq.s32.totalorder %s22, 1
      %p82 = por %p80, %p81
      %p83 = scmp.ne.s32.totalorder %s72, %s73
      %p84 = scmp.eq.s32.totalorder %s22, 0
      %p85 = por %p83, %p84
      %p86 = scmp.ne.s32.totalorder %s72, %s73
      %p87 = scmp.eq.s32.totalorder %s23, 1
      %p88 = por %p86, %p87
      %p90 = scmp.ne.s32.totalorder %s73, %s89
      %p91 = scmp.eq.s32.totalorder %s23, 0
      %p92 = por %p90, %p91
      %s93 = ssub.s32 %s17, %s24
      %p94 = scmp.eq.s32.totalorder %s93, 0
      %s96 = sadd.s32 %s95, 1
      %s97 = scalar_select %p94, %s95, %s96
      %p100 = pneg %p94
      %p101 = scmp.eq.s32.totalorder %s17, 1
      %p102 = por %p100, %p101
      %p103 = scmp.ne.s32.totalorder %s95, %s98
      %p104 = scmp.eq.s32.totalorder %s17, 0
      %p105 = por %p103, %p104
      %p106 = scmp.ne.s32.totalorder %s95, %s98
      %p107 = scmp.eq.s32.totalorder %s22, 1
      %p108 = por %p106, %p107
      %p109 = scmp.ne.s32.totalorder %s98, %s99
      %p110 = scmp.eq.s32.totalorder %s22, 0
      %p111 = por %p109, %p110
      %p112 = scmp.ne.s32.totalorder %s98, %s99
      %p113 = scmp.eq.s32.totalorder %s23, 1
      %p114 = por %p112, %p113
      %p116 = scmp.ne.s32.totalorder %s99, %s115
      %p117 = scmp.eq.s32.totalorder %s23, 0
      %p118 = por %p116, %p117
      %p119 = scmp.le.s32.totalorder 1, %s17
      %p120 = scmp.lt.s32.totalorder %s17, 3
      %p121 = pnand %p119, %p120
      %p122 = pneg %p121
      // Predicated region
      $region9: #{tpu_custom_call.1} parent=5 // pred_check
        _
      $region10: #{tpu_custom_call.1} parent=5 // pred_check_branch
        %124 = sbr.rel (%p121) target = $region12
      $region11: #{tpu_custom_call.1} parent=5 // pred_region
        %s125 = ssub.s32 %s17, 1
        // Predicated region
        $region13: #{tpu_custom_call.1} parent=11 // pred_check
          %p126 = pneg %p38
        $region14: #{tpu_custom_call.1} parent=11 // pred_check_branch
          %128 = sbr.rel (%p126) target = $region16
        $region15: #{tpu_custom_call.1} parent=11 // pred_region
          %130 = vsyncadd [#allocation5], 0
          %s132 = sshll.u32 %s0, 4
          %s133 = int_to_ptr.hbm [resolvable:$true] %s132
          %135 = dma.hbm_to_smem %s133, 16, [#allocation2], [#allocation5]
        $region16: #{tpu_custom_call.1} parent=11 // pred_fallthru
          _
        // Predicated region
        $region17: #{tpu_custom_call.1} parent=11 // pred_check
          %p136 = pneg %p59
        $region18: #{tpu_custom_call.1} parent=11 // pred_check_branch
          %138 = sbr.rel (%p136) target = $region20
        $region19: #{tpu_custom_call.1} parent=11 // pred_region
          %140 = vsyncadd [#allocation3], 0
          %s141 = sshll.u32 %s1, 4
          %s142 = int_to_ptr.hbm [resolvable:$true] %s141
          %s143 = sshll.u32 [#allocation6], 4
          %s144 = int_to_ptr.vmem [resolvable:$true] %s143
          %149 = dma.hbm_to_vmem [thread:$0]  %s142, 1152, %s144, [#allocation3], 128, 128, 8
        $region20: #{tpu_custom_call.1} parent=11 // pred_fallthru
          _
      $region12: #{tpu_custom_call.1} parent=5 // pred_fallthru
        _
      %p150 = scmp.lt.s32.totalorder %s17, 2
      // Predicated region
      $region21: #{tpu_custom_call.1} parent=5 // pred_check
        %p151 = pneg %p150
      $region22: #{tpu_custom_call.1} parent=5 // pred_check_branch
        %153 = sbr.rel (%p151) target = $region24
      $region23: #{tpu_custom_call.1} parent=5 // pred_region
        // Predicated region
        $region25: #{tpu_custom_call.1} parent=23 // pred_check
          %p154 = pneg %p79
        $region26: #{tpu_custom_call.1} parent=23 // pred_check_branch
          %156 = sbr.rel (%p154) target = $region28
        $region27: #{tpu_custom_call.1} parent=23 // pred_region
          %s157 = sand.u32 %s69, 1
          %s158 = scalar_lea.sflag [#allocation8], %s157
          %s159 = sand.u32 %s69, 1
          %s160 = smul.addr %s159, 48
          %s161 = scalar_lea.vmem [#allocation7], %s160
          %163 = vsyncadd %s158, 0
          %s164 = smul.addr %s17, 6
          %s165 = smul.addr %s164, 8
          %s166 = scalar_lea.hbm %s2, %s165
          %s167 = sshll.u32 %s166, 4
          %s168 = int_to_ptr.hbm [resolvable:$true] %s167
          %s169 = sshll.u32 %s161, 4
          %s170 = int_to_ptr.vmem [resolvable:$true] %s169
          %175 = dma.hbm_to_vmem [thread:$0]  %s168, 768, %s170, %s158, 256, 256, 16
        $region28: #{tpu_custom_call.1} parent=23 // pred_fallthru
          _
      $region24: #{tpu_custom_call.1} parent=5 // pred_fallthru
        _
      %p176 = scmp.le.s32.totalorder 1, %s17
      %p177 = scmp.lt.s32.totalorder %s17, 3
      %p178 = pnand %p176, %p177
      %p179 = pneg %p178
      // Predicated region
      $region29: #{tpu_custom_call.1} parent=5 // pred_check
        _
      $region30: #{tpu_custom_call.1} parent=5 // pred_check_branch
        %181 = sbr.rel (%p178) target = $region32
      $region31: #{tpu_custom_call.1} parent=5 // pred_region
        %s182 = ssub.s32 %s17, 1
        // Predicated region
        $region33: #{tpu_custom_call.1} parent=31 // pred_check
          %p183 = pneg %p38
        $region34: #{tpu_custom_call.1} parent=31 // pred_check_branch
          %185 = sbr.rel (%p183) target = $region36
        $region35: #{tpu_custom_call.1} parent=31 // pred_region
          %187 = dma.done [#allocation5], 16
        $region36: #{tpu_custom_call.1} parent=31 // pred_fallthru
          _
        // Predicated region
        $region37: #{tpu_custom_call.1} parent=31 // pred_check
          %p188 = pneg %p59
        $region38: #{tpu_custom_call.1} parent=31 // pred_check_branch
          %190 = sbr.rel (%p188) target = $region40
        $region39: #{tpu_custom_call.1} parent=31 // pred_region
          %192 = dma.done [#allocation3], 1152
        $region40: #{tpu_custom_call.1} parent=31 // pred_fallthru
          _
        %s193 = sand.u32 %s72, 1
        %s194 = scalar_lea.sflag [#allocation8], %s193
        %s195 = sand.u32 %s72, 1
        %s196 = smul.addr %s195, 48
        %s197 = scalar_lea.vmem [#allocation7], %s196
        // Predicated region
        $region41: #{tpu_custom_call.1} parent=31 // pred_check
          %p198 = pneg %p85
        $region42: #{tpu_custom_call.1} parent=31 // pred_check_branch
          %200 = sbr.rel (%p198) target = $region44
        $region43: #{tpu_custom_call.1} parent=31 // pred_region
          %202 = dma.done %s194, 768
        $region44: #{tpu_custom_call.1} parent=31 // pred_fallthru
          _
        %203 = sfence
        %p204 = pneg %p38
        %p205 = pneg %p35
        %p206 = pneg %p59
        %p207 = pneg %p56
        %s208 = sand.u32 %s72, 1
        %s209 = scalar_lea.sflag [#allocation8], %s208
        %s210 = sand.u32 %s72, 1
        %s211 = smul.addr %s210, 48
        %s212 = scalar_lea.vmem [#allocation7], %s211
        %p213 = pneg %p85
        %p214 = pneg %p82
        %p215 = pneg %p111
        %p216 = pneg %p108
        %s217 = sand.u32 %s98, 1
        %s218 = scalar_lea.sflag [#allocation4], %s217
        %s219 = sand.u32 %s98, 1
        %s220 = smul.addr %s219, 48
        %s221 = scalar_lea.vmem [#allocation9], %s220
        %v222 = vld [vmem:[%s197] sm:$0xff]
        %v223 = vld [vmem:[%s197 + $0x8] sm:$0xff]
        %v224 = vadd.f32 %v222, %v223
        %225 = vadd.xlane.f32.xlu0 %v224
        %v226 = vpop.xlane.xlu0 %225
        %s227 = scalar_lea.vmem %s197, 16 [#allocation7]
        %v228 = vld [vmem:[%s227] sm:$0xff]
        %v229 = vld [vmem:[%s227 + $0x8] sm:$0xff]
        %v230 = vadd.f32 %v228, %v229
        %231 = vadd.xlane.f32.xlu0 %v230
        %v232 = vpop.xlane.xlu0 %231
        %s233 = scalar_lea.vmem %s197, 32 [#allocation7]
        %v234 = vld [vmem:[%s233] sm:$0xff]
        %v235 = vld [vmem:[%s233 + $0x8] sm:$0xff]
        %v236 = vadd.f32 %v234, %v235
        %237 = vadd.xlane.f32.xlu0 %v236
        %v238 = vpop.xlane.xlu0 %237
        %s239 = sld [smem:[#allocation2]]
        %v240 = vstv %s239
        %v241 = vadd.f32 %v240, 0.0
        %v242 = vld [vmem:[#allocation6] sm:$0xff]
        %v244 = vperm.slane %v242, 0
        %v245 = vlaneseq
        %v246 = vshrl.u32 %v245, 7
        %248 = vset.pattern.permute.xlu0 %v246
        %249 = vperm.xlu0 %248, %v244
        %v250 = vpop.permute.xlu0 %249
        %v251 = vperm.slane %v242, 1
        %v252 = vlaneseq
        %v253 = vshrl.u32 %v252, 7
        %255 = vset.pattern.permute.xlu0 %v253
        %256 = vperm.xlu0 %255, %v251
        %v257 = vpop.permute.xlu0 %256
        %v258 = vperm.slane %v242, 2
        %v259 = vlaneseq
        %v260 = vshrl.u32 %v259, 7
        %262 = vset.pattern.permute.xlu0 %v260
        %263 = vperm.xlu0 %262, %v258
        %v264 = vpop.permute.xlu0 %263
        %v265 = vperm.slane %v242, 3
        %v266 = vlaneseq
        %v267 = vshrl.u32 %v266, 7
        %269 = vset.pattern.permute.xlu0 %v267
        %270 = vperm.xlu0 %269, %v265
        %v271 = vpop.permute.xlu0 %270
        %v272 = vperm.slane %v242, 4
        %v273 = vlaneseq
        %v274 = vshrl.u32 %v273, 7
        %276 = vset.pattern.permute.xlu0 %v274
        %277 = vperm.xlu0 %276, %v272
        %v278 = vpop.permute.xlu0 %277
        %v279 = vperm.slane %v242, 5
        %v280 = vlaneseq
        %v281 = vshrl.u32 %v280, 7
        %283 = vset.pattern.permute.xlu0 %v281
        %284 = vperm.xlu0 %283, %v279
        %v285 = vpop.permute.xlu0 %284
        %v286 = vperm.slane %v242, 6
        %v287 = vlaneseq
        %v288 = vshrl.u32 %v287, 7
        %290 = vset.pattern.permute.xlu0 %v288
        %291 = vperm.xlu0 %290, %v286
        %v292 = vpop.permute.xlu0 %291
        %v293 = vperm.slane %v242, 7
        %v294 = vlaneseq
        %v295 = vshrl.u32 %v294, 7
        %297 = vset.pattern.permute.xlu0 %v295
        %298 = vperm.xlu0 %297, %v293
        %v299 = vpop.permute.xlu0 %298
        %v308 = vmul.f32 %v226, %v250
        %v309 = vmul.f32 %v226, %v257
        %v310 = vmul.f32 %v226, %v264
        %v311 = vmul.f32 %v226, %v271
        %v312 = vmul.f32 %v226, %v278
        %v313 = vmul.f32 %v226, %v285
        %v314 = vmul.f32 %v226, %v292
        %v315 = vmul.f32 %v226, %v299
        %324 = vset.pattern.permute.xlu0 0
        %325 = vperm.xlu0 %324, %v308
        %v326 = vpop.permute.xlu0 %325
        %327 = vset.pattern.permute.xlu0 0
        %328 = vperm.xlu0 %327, %v309
        %v329 = vpop.permute.xlu0 %328
        %330 = vset.pattern.permute.xlu0 0
        %331 = vperm.xlu0 %330, %v310
        %v332 = vpop.permute.xlu0 %331
        %333 = vset.pattern.permute.xlu0 0
        %334 = vperm.xlu0 %333, %v311
        %v335 = vpop.permute.xlu0 %334
        %336 = vset.pattern.permute.xlu0 0
        %337 = vperm.xlu0 %336, %v312
        %v338 = vpop.permute.xlu0 %337
        %339 = vset.pattern.permute.xlu0 0
        %340 = vperm.xlu0 %339, %v313
        %v341 = vpop.permute.xlu0 %340
        %342 = vset.pattern.permute.xlu0 0
        %343 = vperm.xlu0 %342, %v314
        %v344 = vpop.permute.xlu0 %343
        %345 = vset.pattern.permute.xlu0 0
        %346 = vperm.xlu0 %345, %v315
        %v347 = vpop.permute.xlu0 %346
        %v348 = vlaneseq
        %v349 = vand.u32 %v348, 127
        %v350 = vperm.slane %v326, %v349
        %v351 = vperm.slane %v329, %v349
        %v352 = vperm.slane %v332, %v349
        %v353 = vperm.slane %v335, %v349
        %v354 = vperm.slane %v338, %v349
        %v355 = vperm.slane %v341, %v349
        %v356 = vperm.slane %v344, %v349
        %v357 = vperm.slane %v347, %v349
        %vm358 = vcmask 1041409
        %v359 = vsel %vm358, %v351, %v350
        %vm360 = vcmask 1042434
        %v361 = vsel %vm360, %v352, %v359
        %vm362 = vcmask 1043459
        %v363 = vsel %vm362, %v353, %v361
        %vm364 = vcmask 1044484
        %v365 = vsel %vm364, %v354, %v363
        %vm366 = vcmask 1045509
        %v367 = vsel %vm366, %v355, %v365
        %vm368 = vcmask 1046534
        %v369 = vsel %vm368, %v356, %v367
        %vm370 = vcmask 1047559
        %v371 = vsel %vm370, %v357, %v369
        %vm373 = vcmask 64512
        %v374 = vsel %vm373, %v371, 0.0
        %375 = vadd.xlane.f32.xlu0 %v374
        %v376 = vpop.xlane.xlu0 %375
        %v377 = vadd.f32 %v241, %v376
        %s378 = scalar_lea.vmem [#allocation6], 8
        %v379 = vld [vmem:[%s378] sm:$0xff]
        %v381 = vperm.slane %v379, 0
        %v382 = vlaneseq
        %v383 = vshrl.u32 %v382, 7
        %385 = vset.pattern.permute.xlu0 %v383
        %386 = vperm.xlu0 %385, %v381
        %v387 = vpop.permute.xlu0 %386
        %v388 = vperm.slane %v379, 1
        %v389 = vlaneseq
        %v390 = vshrl.u32 %v389, 7
        %392 = vset.pattern.permute.xlu0 %v390
        %393 = vperm.xlu0 %392, %v388
        %v394 = vpop.permute.xlu0 %393
        %v395 = vperm.slane %v379, 2
        %v396 = vlaneseq
        %v397 = vshrl.u32 %v396, 7
        %399 = vset.pattern.permute.xlu0 %v397
        %400 = vperm.xlu0 %399, %v395
        %v401 = vpop.permute.xlu0 %400
        %v402 = vperm.slane %v379, 3
        %v403 = vlaneseq
        %v404 = vshrl.u32 %v403, 7
        %406 = vset.pattern.permute.xlu0 %v404
        %407 = vperm.xlu0 %406, %v402
        %v408 = vpop.permute.xlu0 %407
        %v409 = vperm.slane %v379, 4
        %v410 = vlaneseq
        %v411 = vshrl.u32 %v410, 7
        %413 = vset.pattern.permute.xlu0 %v411
        %414 = vperm.xlu0 %413, %v409
        %v415 = vpop.permute.xlu0 %414
        %v416 = vperm.slane %v379, 5
        %v417 = vlaneseq
        %v418 = vshrl.u32 %v417, 7
        %420 = vset.pattern.permute.xlu0 %v418
        %421 = vperm.xlu0 %420, %v416
        %v422 = vpop.permute.xlu0 %421
        %v423 = vperm.slane %v379, 6
        %v424 = vlaneseq
        %v425 = vshrl.u32 %v424, 7
        %427 = vset.pattern.permute.xlu0 %v425
        %428 = vperm.xlu0 %427, %v423
        %v429 = vpop.permute.xlu0 %428
        %v430 = vperm.slane %v379, 7
        %v431 = vlaneseq
        %v432 = vshrl.u32 %v431, 7
        %434 = vset.pattern.permute.xlu0 %v432
        %435 = vperm.xlu0 %434, %v430
        %v436 = vpop.permute.xlu0 %435
        %v445 = vmul.f32 %v232, %v387
        %v446 = vmul.f32 %v232, %v394
        %v447 = vmul.f32 %v232, %v401
        %v448 = vmul.f32 %v232, %v408
        %v449 = vmul.f32 %v232, %v415
        %v450 = vmul.f32 %v232, %v422
        %v451 = vmul.f32 %v232, %v429
        %v452 = vmul.f32 %v232, %v436
        %461 = vset.pattern.permute.xlu0 0
        %462 = vperm.xlu0 %461, %v445
        %v463 = vpop.permute.xlu0 %462
        %464 = vset.pattern.permute.xlu0 0
        %465 = vperm.xlu0 %464, %v446
        %v466 = vpop.permute.xlu0 %465
        %467 = vset.pattern.permute.xlu0 0
        %468 = vperm.xlu0 %467, %v447
        %v469 = vpop.permute.xlu0 %468
        %470 = vset.pattern.permute.xlu0 0
        %471 = vperm.xlu0 %470, %v448
        %v472 = vpop.permute.xlu0 %471
        %473 = vset.pattern.permute.xlu0 0
        %474 = vperm.xlu0 %473, %v449
        %v475 = vpop.permute.xlu0 %474
        %476 = vset.pattern.permute.xlu0 0
        %477 = vperm.xlu0 %476, %v450
        %v478 = vpop.permute.xlu0 %477
        %479 = vset.pattern.permute.xlu0 0
        %480 = vperm.xlu0 %479, %v451
        %v481 = vpop.permute.xlu0 %480
        %482 = vset.pattern.permute.xlu0 0
        %483 = vperm.xlu0 %482, %v452
        %v484 = vpop.permute.xlu0 %483
        %v485 = vperm.slane %v463, %v349
        %v486 = vperm.slane %v466, %v349
        %v487 = vperm.slane %v469, %v349
        %v488 = vperm.slane %v472, %v349
        %v489 = vperm.slane %v475, %v349
        %v490 = vperm.slane %v478, %v349
        %v491 = vperm.slane %v481, %v349
        %v492 = vperm.slane %v484, %v349
        %v493 = vsel %vm358, %v486, %v485
        %v494 = vsel %vm360, %v487, %v493
        %v495 = vsel %vm362, %v488, %v494
        %v496 = vsel %vm364, %v489, %v495
        %v497 = vsel %vm366, %v490, %v496
        %v498 = vsel %vm368, %v491, %v497
        %v499 = vsel %vm370, %v492, %v498
        %v501 = vsel %vm373, %v499, 0.0
        %502 = vadd.xlane.f32.xlu0 %v501
        %v503 = vpop.xlane.xlu0 %502
        %v504 = vadd.f32 %v377, %v503
        %s505 = scalar_lea.vmem [#allocation6], 16
        %v506 = vld [vmem:[%s505] sm:$0xff]
        %v508 = vperm.slane %v506, 0
        %v509 = vlaneseq
        %v510 = vshrl.u32 %v509, 7
        %512 = vset.pattern.permute.xlu0 %v510
        %513 = vperm.xlu0 %512, %v508
        %v514 = vpop.permute.xlu0 %513
        %v515 = vperm.slane %v506, 1
        %v516 = vlaneseq
        %v517 = vshrl.u32 %v516, 7
        %519 = vset.pattern.permute.xlu0 %v517
        %520 = vperm.xlu0 %519, %v515
        %v521 = vpop.permute.xlu0 %520
        %v522 = vperm.slane %v506, 2
        %v523 = vlaneseq
        %v524 = vshrl.u32 %v523, 7
        %526 = vset.pattern.permute.xlu0 %v524
        %527 = vperm.xlu0 %526, %v522
        %v528 = vpop.permute.xlu0 %527
        %v529 = vperm.slane %v506, 3
        %v530 = vlaneseq
        %v531 = vshrl.u32 %v530, 7
        %533 = vset.pattern.permute.xlu0 %v531
        %534 = vperm.xlu0 %533, %v529
        %v535 = vpop.permute.xlu0 %534
        %v536 = vperm.slane %v506, 4
        %v537 = vlaneseq
        %v538 = vshrl.u32 %v537, 7
        %540 = vset.pattern.permute.xlu0 %v538
        %541 = vperm.xlu0 %540, %v536
        %v542 = vpop.permute.xlu0 %541
        %v543 = vperm.slane %v506, 5
        %v544 = vlaneseq
        %v545 = vshrl.u32 %v544, 7
        %547 = vset.pattern.permute.xlu0 %v545
        %548 = vperm.xlu0 %547, %v543
        %v549 = vpop.permute.xlu0 %548
        %v550 = vperm.slane %v506, 6
        %v551 = vlaneseq
        %v552 = vshrl.u32 %v551, 7
        %554 = vset.pattern.permute.xlu0 %v552
        %555 = vperm.xlu0 %554, %v550
        %v556 = vpop.permute.xlu0 %555
        %v557 = vperm.slane %v506, 7
        %v558 = vlaneseq
        %v559 = vshrl.u32 %v558, 7
        %561 = vset.pattern.permute.xlu0 %v559
        %562 = vperm.xlu0 %561, %v557
        %v563 = vpop.permute.xlu0 %562
        %v572 = vmul.f32 %v238, %v514
        %v573 = vmul.f32 %v238, %v521
        %v574 = vmul.f32 %v238, %v528
        %v575 = vmul.f32 %v238, %v535
        %v576 = vmul.f32 %v238, %v542
        %v577 = vmul.f32 %v238, %v549
        %v578 = vmul.f32 %v238, %v556
        %v579 = vmul.f32 %v238, %v563
        %588 = vset.pattern.permute.xlu0 0
        %589 = vperm.xlu0 %588, %v572
        %v590 = vpop.permute.xlu0 %589
        %591 = vset.pattern.permute.xlu0 0
        %592 = vperm.xlu0 %591, %v573
        %v593 = vpop.permute.xlu0 %592
        %594 = vset.pattern.permute.xlu0 0
        %595 = vperm.xlu0 %594, %v574
        %v596 = vpop.permute.xlu0 %595
        %597 = vset.pattern.permute.xlu0 0
        %598 = vperm.xlu0 %597, %v575
        %v599 = vpop.permute.xlu0 %598
        %600 = vset.pattern.permute.xlu0 0
        %601 = vperm.xlu0 %600, %v576
        %v602 = vpop.permute.xlu0 %601
        %603 = vset.pattern.permute.xlu0 0
        %604 = vperm.xlu0 %603, %v577
        %v605 = vpop.permute.xlu0 %604
        %606 = vset.pattern.permute.xlu0 0
        %607 = vperm.xlu0 %606, %v578
        %v608 = vpop.permute.xlu0 %607
        %609 = vset.pattern.permute.xlu0 0
        %610 = vperm.xlu0 %609, %v579
        %v611 = vpop.permute.xlu0 %610
        %v612 = vperm.slane %v590, %v349
        %v613 = vperm.slane %v593, %v349
        %v614 = vperm.slane %v596, %v349
        %v615 = vperm.slane %v599, %v349
        %v616 = vperm.slane %v602, %v349
        %v617 = vperm.slane %v605, %v349
        %v618 = vperm.slane %v608, %v349
        %v619 = vperm.slane %v611, %v349
        %v620 = vsel %vm358, %v613, %v612
        %v621 = vsel %vm360, %v614, %v620
        %v622 = vsel %vm362, %v615, %v621
        %v623 = vsel %vm364, %v616, %v622
        %v624 = vsel %vm366, %v617, %v623
        %v625 = vsel %vm368, %v618, %v624
        %v626 = vsel %vm370, %v619, %v625
        %v628 = vsel %vm373, %v626, 0.0
        %629 = vadd.xlane.f32.xlu0 %v628
        %v630 = vpop.xlane.xlu0 %629
        %v631 = vadd.f32 %v504, %v630
        %v632 = vsub.f32 0.0, %v631
        %v633 = vmul.f32 %v632, 1.442695
        %v634 = vpow.pop %v633
        %v635 = vadd.f32 %v634, 1.0
        %v636 = vrcp.pop %v635
        %v637 = vmul.f32 %v635, %v636
        %v638 = vsub.f32 1.0, %v637
        %v639 = vmul.f32 %v636, %v638
        %v640 = vadd.f32 %v636, %v639
        %vm641 = vweird.f32 %v635
        %vm642 = vweird.f32 %v636
        %vm643 = vmor %vm641, %vm642
        %v644 = vsel %vm643, %v636, %v640
        %v645 = vand.u32 2147483647, %v635
        %vm646 = vcmp.eq.f32.partialorder %v645, 8.507059e+37
        %v647 = vand.u32 %v635, 2147483648
        %v648 = vor.u32 1.1754944e-38, %v647
        %v649 = vsel %vm646, %v648, %v644
        %v650 = vmul.f32 1.0, %v649
        %v651 = vadd.f32 %v650, 1.0
        %v652 = vmul.f32 %v222, %v651
        %v653 = vmul.f32 %v223, %v651
        %654 = vst [vmem:[%s221] sm:$0xff] %v652
        %655 = vst [vmem:[%s221 + $0x8] sm:$0xff] %v653
        %s656 = sld [smem:[#allocation2 + $0x1]]
        %v657 = vstv %s656
        %v658 = vadd.f32 %v657, 0.0
        %s659 = scalar_lea.vmem [#allocation6], 24
        %v660 = vld [vmem:[%s659] sm:$0xff]
        %v662 = vperm.slane %v660, 0
        %v663 = vlaneseq
        %v664 = vshrl.u32 %v663, 7
        %666 = vset.pattern.permute.xlu0 %v664
        %667 = vperm.xlu0 %666, %v662
        %v668 = vpop.permute.xlu0 %667
        %v669 = vperm.slane %v660, 1
        %v670 = vlaneseq
        %v671 = vshrl.u32 %v670, 7
        %673 = vset.pattern.permute.xlu0 %v671
        %674 = vperm.xlu0 %673, %v669
        %v675 = vpop.permute.xlu0 %674
        %v676 = vperm.slane %v660, 2
        %v677 = vlaneseq
        %v678 = vshrl.u32 %v677, 7
        %680 = vset.pattern.permute.xlu0 %v678
        %681 = vperm.xlu0 %680, %v676
        %v682 = vpop.permute.xlu0 %681
        %v683 = vperm.slane %v660, 3
        %v684 = vlaneseq
        %v685 = vshrl.u32 %v684, 7
        %687 = vset.pattern.permute.xlu0 %v685
        %688 = vperm.xlu0 %687, %v683
        %v689 = vpop.permute.xlu0 %688
        %v690 = vperm.slane %v660, 4
        %v691 = vlaneseq
        %v692 = vshrl.u32 %v691, 7
        %694 = vset.pattern.permute.xlu0 %v692
        %695 = vperm.xlu0 %694, %v690
        %v696 = vpop.permute.xlu0 %695
        %v697 = vperm.slane %v660, 5
        %v698 = vlaneseq
        %v699 = vshrl.u32 %v698, 7
        %701 = vset.pattern.permute.xlu0 %v699
        %702 = vperm.xlu0 %701, %v697
        %v703 = vpop.permute.xlu0 %702
        %v704 = vperm.slane %v660, 6
        %v705 = vlaneseq
        %v706 = vshrl.u32 %v705, 7
        %708 = vset.pattern.permute.xlu0 %v706
        %709 = vperm.xlu0 %708, %v704
        %v710 = vpop.permute.xlu0 %709
        %v711 = vperm.slane %v660, 7
        %v712 = vlaneseq
        %v713 = vshrl.u32 %v712, 7
        %715 = vset.pattern.permute.xlu0 %v713
        %716 = vperm.xlu0 %715, %v711
        %v717 = vpop.permute.xlu0 %716
        %v726 = vmul.f32 %v226, %v668
        %v727 = vmul.f32 %v226, %v675
        %v728 = vmul.f32 %v226, %v682
        %v729 = vmul.f32 %v226, %v689
        %v730 = vmul.f32 %v226, %v696
        %v731 = vmul.f32 %v226, %v703
        %v732 = vmul.f32 %v226, %v710
        %v733 = vmul.f32 %v226, %v717
        %742 = vset.pattern.permute.xlu0 0
        %743 = vperm.xlu0 %742, %v726
        %v744 = vpop.permute.xlu0 %743
        %745 = vset.pattern.permute.xlu0 0
        %746 = vperm.xlu0 %745, %v727
        %v747 = vpop.permute.xlu0 %746
        %748 = vset.pattern.permute.xlu0 0
        %749 = vperm.xlu0 %748, %v728
        %v750 = vpop.permute.xlu0 %749
        %751 = vset.pattern.permute.xlu0 0
        %752 = vperm.xlu0 %751, %v729
        %v753 = vpop.permute.xlu0 %752
        %754 = vset.pattern.permute.xlu0 0
        %755 = vperm.xlu0 %754, %v730
        %v756 = vpop.permute.xlu0 %755
        %757 = vset.pattern.permute.xlu0 0
        %758 = vperm.xlu0 %757, %v731
        %v759 = vpop.permute.xlu0 %758
        %760 = vset.pattern.permute.xlu0 0
        %761 = vperm.xlu0 %760, %v732
        %v762 = vpop.permute.xlu0 %761
        %763 = vset.pattern.permute.xlu0 0
        %764 = vperm.xlu0 %763, %v733
        %v765 = vpop.permute.xlu0 %764
        %v766 = vperm.slane %v744, %v349
        %v767 = vperm.slane %v747, %v349
        %v768 = vperm.slane %v750, %v349
        %v769 = vperm.slane %v753, %v349
        %v770 = vperm.slane %v756, %v349
        %v771 = vperm.slane %v759, %v349
        %v772 = vperm.slane %v762, %v349
        %v773 = vperm.slane %v765, %v349
        %v774 = vsel %vm358, %v767, %v766
        %v775 = vsel %vm360, %v768, %v774
        %v776 = vsel %vm362, %v769, %v775
        %v777 = vsel %vm364, %v770, %v776
        %v778 = vsel %vm366, %v771, %v777
        %v779 = vsel %vm368, %v772, %v778
        %v780 = vsel %vm370, %v773, %v779
        %v782 = vsel %vm373, %v780, 0.0
        %783 = vadd.xlane.f32.xlu0 %v782
        %v784 = vpop.xlane.xlu0 %783
        %v785 = vadd.f32 %v658, %v784
        %s786 = scalar_lea.vmem [#allocation6], 32
        %v787 = vld [vmem:[%s786] sm:$0xff]
        %v789 = vperm.slane %v787, 0
        %v790 = vlaneseq
        %v791 = vshrl.u32 %v790, 7
        %793 = vset.pattern.permute.xlu0 %v791
        %794 = vperm.xlu0 %793, %v789
        %v795 = vpop.permute.xlu0 %794
        %v796 = vperm.slane %v787, 1
        %v797 = vlaneseq
        %v798 = vshrl.u32 %v797, 7
        %800 = vset.pattern.permute.xlu0 %v798
        %801 = vperm.xlu0 %800, %v796
        %v802 = vpop.permute.xlu0 %801
        %v803 = vperm.slane %v787, 2
        %v804 = vlaneseq
        %v805 = vshrl.u32 %v804, 7
        %807 = vset.pattern.permute.xlu0 %v805
        %808 = vperm.xlu0 %807, %v803
        %v809 = vpop.permute.xlu0 %808
        %v810 = vperm.slane %v787, 3
        %v811 = vlaneseq
        %v812 = vshrl.u32 %v811, 7
        %814 = vset.pattern.permute.xlu0 %v812
        %815 = vperm.xlu0 %814, %v810
        %v816 = vpop.permute.xlu0 %815
        %v817 = vperm.slane %v787, 4
        %v818 = vlaneseq
        %v819 = vshrl.u32 %v818, 7
        %821 = vset.pattern.permute.xlu0 %v819
        %822 = vperm.xlu0 %821, %v817
        %v823 = vpop.permute.xlu0 %822
        %v824 = vperm.slane %v787, 5
        %v825 = vlaneseq
        %v826 = vshrl.u32 %v825, 7
        %828 = vset.pattern.permute.xlu0 %v826
        %829 = vperm.xlu0 %828, %v824
        %v830 = vpop.permute.xlu0 %829
        %v831 = vperm.slane %v787, 6
        %v832 = vlaneseq
        %v833 = vshrl.u32 %v832, 7
        %835 = vset.pattern.permute.xlu0 %v833
        %836 = vperm.xlu0 %835, %v831
        %v837 = vpop.permute.xlu0 %836
        %v838 = vperm.slane %v787, 7
        %v839 = vlaneseq
        %v840 = vshrl.u32 %v839, 7
        %842 = vset.pattern.permute.xlu0 %v840
        %843 = vperm.xlu0 %842, %v838
        %v844 = vpop.permute.xlu0 %843
        %v853 = vmul.f32 %v232, %v795
        %v854 = vmul.f32 %v232, %v802
        %v855 = vmul.f32 %v232, %v809
        %v856 = vmul.f32 %v232, %v816
        %v857 = vmul.f32 %v232, %v823
        %v858 = vmul.f32 %v232, %v830
        %v859 = vmul.f32 %v232, %v837
        %v860 = vmul.f32 %v232, %v844
        %869 = vset.pattern.permute.xlu0 0
        %870 = vperm.xlu0 %869, %v853
        %v871 = vpop.permute.xlu0 %870
        %872 = vset.pattern.permute.xlu0 0
        %873 = vperm.xlu0 %872, %v854
        %v874 = vpop.permute.xlu0 %873
        %875 = vset.pattern.permute.xlu0 0
        %876 = vperm.xlu0 %875, %v855
        %v877 = vpop.permute.xlu0 %876
        %878 = vset.pattern.permute.xlu0 0
        %879 = vperm.xlu0 %878, %v856
        %v880 = vpop.permute.xlu0 %879
        %881 = vset.pattern.permute.xlu0 0
        %882 = vperm.xlu0 %881, %v857
        %v883 = vpop.permute.xlu0 %882
        %884 = vset.pattern.permute.xlu0 0
        %885 = vperm.xlu0 %884, %v858
        %v886 = vpop.permute.xlu0 %885
        %887 = vset.pattern.permute.xlu0 0
        %888 = vperm.xlu0 %887, %v859
        %v889 = vpop.permute.xlu0 %888
        %890 = vset.pattern.permute.xlu0 0
        %891 = vperm.xlu0 %890, %v860
        %v892 = vpop.permute.xlu0 %891
        %v893 = vperm.slane %v871, %v349
        %v894 = vperm.slane %v874, %v349
        %v895 = vperm.slane %v877, %v349
        %v896 = vperm.slane %v880, %v349
        %v897 = vperm.slane %v883, %v349
        %v898 = vperm.slane %v886, %v349
        %v899 = vperm.slane %v889, %v349
        %v900 = vperm.slane %v892, %v349
        %v901 = vsel %vm358, %v894, %v893
        %v902 = vsel %vm360, %v895, %v901
        %v903 = vsel %vm362, %v896, %v902
        %v904 = vsel %vm364, %v897, %v903
        %v905 = vsel %vm366, %v898, %v904
        %v906 = vsel %vm368, %v899, %v905
        %v907 = vsel %vm370, %v900, %v906
        %v909 = vsel %vm373, %v907, 0.0
        %910 = vadd.xlane.f32.xlu0 %v909
        %v911 = vpop.xlane.xlu0 %910
        %v912 = vadd.f32 %v785, %v911
        %s913 = scalar_lea.vmem [#allocation6], 40
        %v914 = vld [vmem:[%s913] sm:$0xff]
        %v916 = vperm.slane %v914, 0
        %v917 = vlaneseq
        %v918 = vshrl.u32 %v917, 7
        %920 = vset.pattern.permute.xlu0 %v918
        %921 = vperm.xlu0 %920, %v916
        %v922 = vpop.permute.xlu0 %921
        %v923 = vperm.slane %v914, 1
        %v924 = vlaneseq
        %v925 = vshrl.u32 %v924, 7
        %927 = vset.pattern.permute.xlu0 %v925
        %928 = vperm.xlu0 %927, %v923
        %v929 = vpop.permute.xlu0 %928
        %v930 = vperm.slane %v914, 2
        %v931 = vlaneseq
        %v932 = vshrl.u32 %v931, 7
        %934 = vset.pattern.permute.xlu0 %v932
        %935 = vperm.xlu0 %934, %v930
        %v936 = vpop.permute.xlu0 %935
        %v937 = vperm.slane %v914, 3
        %v938 = vlaneseq
        %v939 = vshrl.u32 %v938, 7
        %941 = vset.pattern.permute.xlu0 %v939
        %942 = vperm.xlu0 %941, %v937
        %v943 = vpop.permute.xlu0 %942
        %v944 = vperm.slane %v914, 4
        %v945 = vlaneseq
        %v946 = vshrl.u32 %v945, 7
        %948 = vset.pattern.permute.xlu0 %v946
        %949 = vperm.xlu0 %948, %v944
        %v950 = vpop.permute.xlu0 %949
        %v951 = vperm.slane %v914, 5
        %v952 = vlaneseq
        %v953 = vshrl.u32 %v952, 7
        %955 = vset.pattern.permute.xlu0 %v953
        %956 = vperm.xlu0 %955, %v951
        %v957 = vpop.permute.xlu0 %956
        %v958 = vperm.slane %v914, 6
        %v959 = vlaneseq
        %v960 = vshrl.u32 %v959, 7
        %962 = vset.pattern.permute.xlu0 %v960
        %963 = vperm.xlu0 %962, %v958
        %v964 = vpop.permute.xlu0 %963
        %v965 = vperm.slane %v914, 7
        %v966 = vlaneseq
        %v967 = vshrl.u32 %v966, 7
        %969 = vset.pattern.permute.xlu0 %v967
        %970 = vperm.xlu0 %969, %v965
        %v971 = vpop.permute.xlu0 %970
        %v980 = vmul.f32 %v238, %v922
        %v981 = vmul.f32 %v238, %v929
        %v982 = vmul.f32 %v238, %v936
        %v983 = vmul.f32 %v238, %v943
        %v984 = vmul.f32 %v238, %v950
        %v985 = vmul.f32 %v238, %v957
        %v986 = vmul.f32 %v238, %v964
        %v987 = vmul.f32 %v238, %v971
        %996 = vset.pattern.permute.xlu0 0
        %997 = vperm.xlu0 %996, %v980
        %v998 = vpop.permute.xlu0 %997
        %999 = vset.pattern.permute.xlu0 0
        %1000 = vperm.xlu0 %999, %v981
        %v1001 = vpop.permute.xlu0 %1000
        %1002 = vset.pattern.permute.xlu0 0
        %1003 = vperm.xlu0 %1002, %v982
        %v1004 = vpop.permute.xlu0 %1003
        %1005 = vset.pattern.permute.xlu0 0
        %1006 = vperm.xlu0 %1005, %v983
        %v1007 = vpop.permute.xlu0 %1006
        %1008 = vset.pattern.permute.xlu0 0
        %1009 = vperm.xlu0 %1008, %v984
        %v1010 = vpop.permute.xlu0 %1009
        %1011 = vset.pattern.permute.xlu0 0
        %1012 = vperm.xlu0 %1011, %v985
        %v1013 = vpop.permute.xlu0 %1012
        %1014 = vset.pattern.permute.xlu0 0
        %1015 = vperm.xlu0 %1014, %v986
        %v1016 = vpop.permute.xlu0 %1015
        %1017 = vset.pattern.permute.xlu0 0
        %1018 = vperm.xlu0 %1017, %v987
        %v1019 = vpop.permute.xlu0 %1018
        %v1020 = vperm.slane %v998, %v349
        %v1021 = vperm.slane %v1001, %v349
        %v1022 = vperm.slane %v1004, %v349
        %v1023 = vperm.slane %v1007, %v349
        %v1024 = vperm.slane %v1010, %v349
        %v1025 = vperm.slane %v1013, %v349
        %v1026 = vperm.slane %v1016, %v349
        %v1027 = vperm.slane %v1019, %v349
        %v1028 = vsel %vm358, %v1021, %v1020
        %v1029 = vsel %vm360, %v1022, %v1028
        %v1030 = vsel %vm362, %v1023, %v1029
        %v1031 = vsel %vm364, %v1024, %v1030
        %v1032 = vsel %vm366, %v1025, %v1031
        %v1033 = vsel %vm368, %v1026, %v1032
        %v1034 = vsel %vm370, %v1027, %v1033
        %v1036 = vsel %vm373, %v1034, 0.0
        %1037 = vadd.xlane.f32.xlu0 %v1036
        %v1038 = vpop.xlane.xlu0 %1037
        %v1039 = vadd.f32 %v912, %v1038
        %v1040 = vsub.f32 0.0, %v1039
        %v1041 = vmul.f32 %v1040, 1.442695
        %v1042 = vpow.pop %v1041
        %v1043 = vadd.f32 %v1042, 1.0
        %v1044 = vrcp.pop %v1043
        %v1045 = vmul.f32 %v1043, %v1044
        %v1046 = vsub.f32 1.0, %v1045
        %v1047 = vmul.f32 %v1044, %v1046
        %v1048 = vadd.f32 %v1044, %v1047
        %vm1049 = vweird.f32 %v1043
        %vm1050 = vweird.f32 %v1044
        %vm1051 = vmor %vm1049, %vm1050
        %v1052 = vsel %vm1051, %v1044, %v1048
        %v1053 = vand.u32 2147483647, %v1043
        %vm1054 = vcmp.eq.f32.partialorder %v1053, 8.507059e+37
        %v1055 = vand.u32 %v1043, 2147483648
        %v1056 = vor.u32 1.1754944e-38, %v1055
        %v1057 = vsel %vm1054, %v1056, %v1052
        %v1058 = vmul.f32 1.0, %v1057
        %v1059 = vadd.f32 %v1058, 1.0
        %v1060 = vld [vmem:[%s227] sm:$0xff]
        %v1061 = vld [vmem:[%s227 + $0x8] sm:$0xff]
        %v1062 = vmul.f32 %v1060, %v1059
        %v1063 = vmul.f32 %v1061, %v1059
        %s1064 = scalar_lea.vmem %s221, 16 [#allocation9]
        %1065 = vst [vmem:[%s1064] sm:$0xff] %v1062
        %1066 = vst [vmem:[%s1064 + $0x8] sm:$0xff] %v1063
        %s1067 = sld [smem:[#allocation2 + $0x2]]
        %v1068 = vstv %s1067
        %v1069 = vadd.f32 %v1068, 0.0
        %s1070 = scalar_lea.vmem [#allocation6], 48
        %v1071 = vld [vmem:[%s1070] sm:$0xff]
        %v1073 = vperm.slane %v1071, 0
        %v1074 = vlaneseq
        %v1075 = vshrl.u32 %v1074, 7
        %1077 = vset.pattern.permute.xlu0 %v1075
        %1078 = vperm.xlu0 %1077, %v1073
        %v1079 = vpop.permute.xlu0 %1078
        %v1080 = vperm.slane %v1071, 1
        %v1081 = vlaneseq
        %v1082 = vshrl.u32 %v1081, 7
        %1084 = vset.pattern.permute.xlu0 %v1082
        %1085 = vperm.xlu0 %1084, %v1080
        %v1086 = vpop.permute.xlu0 %1085
        %v1087 = vperm.slane %v1071, 2
        %v1088 = vlaneseq
        %v1089 = vshrl.u32 %v1088, 7
        %1091 = vset.pattern.permute.xlu0 %v1089
        %1092 = vperm.xlu0 %1091, %v1087
        %v1093 = vpop.permute.xlu0 %1092
        %v1094 = vperm.slane %v1071, 3
        %v1095 = vlaneseq
        %v1096 = vshrl.u32 %v1095, 7
        %1098 = vset.pattern.permute.xlu0 %v1096
        %1099 = vperm.xlu0 %1098, %v1094
        %v1100 = vpop.permute.xlu0 %1099
        %v1101 = vperm.slane %v1071, 4
        %v1102 = vlaneseq
        %v1103 = vshrl.u32 %v1102, 7
        %1105 = vset.pattern.permute.xlu0 %v1103
        %1106 = vperm.xlu0 %1105, %v1101
        %v1107 = vpop.permute.xlu0 %1106
        %v1108 = vperm.slane %v1071, 5
        %v1109 = vlaneseq
        %v1110 = vshrl.u32 %v1109, 7
        %1112 = vset.pattern.permute.xlu0 %v1110
        %1113 = vperm.xlu0 %1112, %v1108
        %v1114 = vpop.permute.xlu0 %1113
        %v1115 = vperm.slane %v1071, 6
        %v1116 = vlaneseq
        %v1117 = vshrl.u32 %v1116, 7
        %1119 = vset.pattern.permute.xlu0 %v1117
        %1120 = vperm.xlu0 %1119, %v1115
        %v1121 = vpop.permute.xlu0 %1120
        %v1122 = vperm.slane %v1071, 7
        %v1123 = vlaneseq
        %v1124 = vshrl.u32 %v1123, 7
        %1126 = vset.pattern.permute.xlu0 %v1124
        %1127 = vperm.xlu0 %1126, %v1122
        %v1128 = vpop.permute.xlu0 %1127
        %v1137 = vmul.f32 %v226, %v1079
        %v1138 = vmul.f32 %v226, %v1086
        %v1139 = vmul.f32 %v226, %v1093
        %v1140 = vmul.f32 %v226, %v1100
        %v1141 = vmul.f32 %v226, %v1107
        %v1142 = vmul.f32 %v226, %v1114
        %v1143 = vmul.f32 %v226, %v1121
        %v1144 = vmul.f32 %v226, %v1128
        %1153 = vset.pattern.permute.xlu0 0
        %1154 = vperm.xlu0 %1153, %v1137
        %v1155 = vpop.permute.xlu0 %1154
        %1156 = vset.pattern.permute.xlu0 0
        %1157 = vperm.xlu0 %1156, %v1138
        %v1158 = vpop.permute.xlu0 %1157
        %1159 = vset.pattern.permute.xlu0 0
        %1160 = vperm.xlu0 %1159, %v1139
        %v1161 = vpop.permute.xlu0 %1160
        %1162 = vset.pattern.permute.xlu0 0
        %1163 = vperm.xlu0 %1162, %v1140
        %v1164 = vpop.permute.xlu0 %1163
        %1165 = vset.pattern.permute.xlu0 0
        %1166 = vperm.xlu0 %1165, %v1141
        %v1167 = vpop.permute.xlu0 %1166
        %1168 = vset.pattern.permute.xlu0 0
        %1169 = vperm.xlu0 %1168, %v1142
        %v1170 = vpop.permute.xlu0 %1169
        %1171 = vset.pattern.permute.xlu0 0
        %1172 = vperm.xlu0 %1171, %v1143
        %v1173 = vpop.permute.xlu0 %1172
        %1174 = vset.pattern.permute.xlu0 0
        %1175 = vperm.xlu0 %1174, %v1144
        %v1176 = vpop.permute.xlu0 %1175
        %v1177 = vperm.slane %v1155, %v349
        %v1178 = vperm.slane %v1158, %v349
        %v1179 = vperm.slane %v1161, %v349
        %v1180 = vperm.slane %v1164, %v349
        %v1181 = vperm.slane %v1167, %v349
        %v1182 = vperm.slane %v1170, %v349
        %v1183 = vperm.slane %v1173, %v349
        %v1184 = vperm.slane %v1176, %v349
        %v1185 = vsel %vm358, %v1178, %v1177
        %v1186 = vsel %vm360, %v1179, %v1185
        %v1187 = vsel %vm362, %v1180, %v1186
        %v1188 = vsel %vm364, %v1181, %v1187
        %v1189 = vsel %vm366, %v1182, %v1188
        %v1190 = vsel %vm368, %v1183, %v1189
        %v1191 = vsel %vm370, %v1184, %v1190
        %v1193 = vsel %vm373, %v1191, 0.0
        %1194 = vadd.xlane.f32.xlu0 %v1193
        %v1195 = vpop.xlane.xlu0 %1194
        %v1196 = vadd.f32 %v1069, %v1195
        %s1197 = scalar_lea.vmem [#allocation6], 56
        %v1198 = vld [vmem:[%s1197] sm:$0xff]
        %v1200 = vperm.slane %v1198, 0
        %v1201 = vlaneseq
        %v1202 = vshrl.u32 %v1201, 7
        %1204 = vset.pattern.permute.xlu0 %v1202
        %1205 = vperm.xlu0 %1204, %v1200
        %v1206 = vpop.permute.xlu0 %1205
        %v1207 = vperm.slane %v1198, 1
        %v1208 = vlaneseq
        %v1209 = vshrl.u32 %v1208, 7
        %1211 = vset.pattern.permute.xlu0 %v1209
        %1212 = vperm.xlu0 %1211, %v1207
        %v1213 = vpop.permute.xlu0 %1212
        %v1214 = vperm.slane %v1198, 2
        %v1215 = vlaneseq
        %v1216 = vshrl.u32 %v1215, 7
        %1218 = vset.pattern.permute.xlu0 %v1216
        %1219 = vperm.xlu0 %1218, %v1214
        %v1220 = vpop.permute.xlu0 %1219
        %v1221 = vperm.slane %v1198, 3
        %v1222 = vlaneseq
        %v1223 = vshrl.u32 %v1222, 7
        %1225 = vset.pattern.permute.xlu0 %v1223
        %1226 = vperm.xlu0 %1225, %v1221
        %v1227 = vpop.permute.xlu0 %1226
        %v1228 = vperm.slane %v1198, 4
        %v1229 = vlaneseq
        %v1230 = vshrl.u32 %v1229, 7
        %1232 = vset.pattern.permute.xlu0 %v1230
        %1233 = vperm.xlu0 %1232, %v1228
        %v1234 = vpop.permute.xlu0 %1233
        %v1235 = vperm.slane %v1198, 5
        %v1236 = vlaneseq
        %v1237 = vshrl.u32 %v1236, 7
        %1239 = vset.pattern.permute.xlu0 %v1237
        %1240 = vperm.xlu0 %1239, %v1235
        %v1241 = vpop.permute.xlu0 %1240
        %v1242 = vperm.slane %v1198, 6
        %v1243 = vlaneseq
        %v1244 = vshrl.u32 %v1243, 7
        %1246 = vset.pattern.permute.xlu0 %v1244
        %1247 = vperm.xlu0 %1246, %v1242
        %v1248 = vpop.permute.xlu0 %1247
        %v1249 = vperm.slane %v1198, 7
        %v1250 = vlaneseq
        %v1251 = vshrl.u32 %v1250, 7
        %1253 = vset.pattern.permute.xlu0 %v1251
        %1254 = vperm.xlu0 %1253, %v1249
        %v1255 = vpop.permute.xlu0 %1254
        %v1264 = vmul.f32 %v232, %v1206
        %v1265 = vmul.f32 %v232, %v1213
        %v1266 = vmul.f32 %v232, %v1220
        %v1267 = vmul.f32 %v232, %v1227
        %v1268 = vmul.f32 %v232, %v1234
        %v1269 = vmul.f32 %v232, %v1241
        %v1270 = vmul.f32 %v232, %v1248
        %v1271 = vmul.f32 %v232, %v1255
        %1280 = vset.pattern.permute.xlu0 0
        %1281 = vperm.xlu0 %1280, %v1264
        %v1282 = vpop.permute.xlu0 %1281
        %1283 = vset.pattern.permute.xlu0 0
        %1284 = vperm.xlu0 %1283, %v1265
        %v1285 = vpop.permute.xlu0 %1284
        %1286 = vset.pattern.permute.xlu0 0
        %1287 = vperm.xlu0 %1286, %v1266
        %v1288 = vpop.permute.xlu0 %1287
        %1289 = vset.pattern.permute.xlu0 0
        %1290 = vperm.xlu0 %1289, %v1267
        %v1291 = vpop.permute.xlu0 %1290
        %1292 = vset.pattern.permute.xlu0 0
        %1293 = vperm.xlu0 %1292, %v1268
        %v1294 = vpop.permute.xlu0 %1293
        %1295 = vset.pattern.permute.xlu0 0
        %1296 = vperm.xlu0 %1295, %v1269
        %v1297 = vpop.permute.xlu0 %1296
        %1298 = vset.pattern.permute.xlu0 0
        %1299 = vperm.xlu0 %1298, %v1270
        %v1300 = vpop.permute.xlu0 %1299
        %1301 = vset.pattern.permute.xlu0 0
        %1302 = vperm.xlu0 %1301, %v1271
        %v1303 = vpop.permute.xlu0 %1302
        %v1304 = vperm.slane %v1282, %v349
        %v1305 = vperm.slane %v1285, %v349
        %v1306 = vperm.slane %v1288, %v349
        %v1307 = vperm.slane %v1291, %v349
        %v1308 = vperm.slane %v1294, %v349
        %v1309 = vperm.slane %v1297, %v349
        %v1310 = vperm.slane %v1300, %v349
        %v1311 = vperm.slane %v1303, %v349
        %v1312 = vsel %vm358, %v1305, %v1304
        %v1313 = vsel %vm360, %v1306, %v1312
        %v1314 = vsel %vm362, %v1307, %v1313
        %v1315 = vsel %vm364, %v1308, %v1314
        %v1316 = vsel %vm366, %v1309, %v1315
        %v1317 = vsel %vm368, %v1310, %v1316
        %v1318 = vsel %vm370, %v1311, %v1317
        %v1320 = vsel %vm373, %v1318, 0.0
        %1321 = vadd.xlane.f32.xlu0 %v1320
        %v1322 = vpop.xlane.xlu0 %1321
        %v1323 = vadd.f32 %v1196, %v1322
        %s1324 = scalar_lea.vmem [#allocation6], 64
        %v1325 = vld [vmem:[%s1324] sm:$0xff]
        %v1327 = vperm.slane %v1325, 0
        %v1328 = vlaneseq
        %v1329 = vshrl.u32 %v1328, 7
        %1331 = vset.pattern.permute.xlu0 %v1329
        %1332 = vperm.xlu0 %1331, %v1327
        %v1333 = vpop.permute.xlu0 %1332
        %v1334 = vperm.slane %v1325, 1
        %v1335 = vlaneseq
        %v1336 = vshrl.u32 %v1335, 7
        %1338 = vset.pattern.permute.xlu0 %v1336
        %1339 = vperm.xlu0 %1338, %v1334
        %v1340 = vpop.permute.xlu0 %1339
        %v1341 = vperm.slane %v1325, 2
        %v1342 = vlaneseq
        %v1343 = vshrl.u32 %v1342, 7
        %1345 = vset.pattern.permute.xlu0 %v1343
        %1346 = vperm.xlu0 %1345, %v1341
        %v1347 = vpop.permute.xlu0 %1346
        %v1348 = vperm.slane %v1325, 3
        %v1349 = vlaneseq
        %v1350 = vshrl.u32 %v1349, 7
        %1352 = vset.pattern.permute.xlu0 %v1350
        %1353 = vperm.xlu0 %1352, %v1348
        %v1354 = vpop.permute.xlu0 %1353
        %v1355 = vperm.slane %v1325, 4
        %v1356 = vlaneseq
        %v1357 = vshrl.u32 %v1356, 7
        %1359 = vset.pattern.permute.xlu0 %v1357
        %1360 = vperm.xlu0 %1359, %v1355
        %v1361 = vpop.permute.xlu0 %1360
        %v1362 = vperm.slane %v1325, 5
        %v1363 = vlaneseq
        %v1364 = vshrl.u32 %v1363, 7
        %1366 = vset.pattern.permute.xlu0 %v1364
        %1367 = vperm.xlu0 %1366, %v1362
        %v1368 = vpop.permute.xlu0 %1367
        %v1369 = vperm.slane %v1325, 6
        %v1370 = vlaneseq
        %v1371 = vshrl.u32 %v1370, 7
        %1373 = vset.pattern.permute.xlu0 %v1371
        %1374 = vperm.xlu0 %1373, %v1369
        %v1375 = vpop.permute.xlu0 %1374
        %v1376 = vperm.slane %v1325, 7
        %v1377 = vlaneseq
        %v1378 = vshrl.u32 %v1377, 7
        %1380 = vset.pattern.permute.xlu0 %v1378
        %1381 = vperm.xlu0 %1380, %v1376
        %v1382 = vpop.permute.xlu0 %1381
        %v1391 = vmul.f32 %v238, %v1333
        %v1392 = vmul.f32 %v238, %v1340
        %v1393 = vmul.f32 %v238, %v1347
        %v1394 = vmul.f32 %v238, %v1354
        %v1395 = vmul.f32 %v238, %v1361
        %v1396 = vmul.f32 %v238, %v1368
        %v1397 = vmul.f32 %v238, %v1375
        %v1398 = vmul.f32 %v238, %v1382
        %1407 = vset.pattern.permute.xlu0 0
        %1408 = vperm.xlu0 %1407, %v1391
        %v1409 = vpop.permute.xlu0 %1408
        %1410 = vset.pattern.permute.xlu0 0
        %1411 = vperm.xlu0 %1410, %v1392
        %v1412 = vpop.permute.xlu0 %1411
        %1413 = vset.pattern.permute.xlu0 0
        %1414 = vperm.xlu0 %1413, %v1393
        %v1415 = vpop.permute.xlu0 %1414
        %1416 = vset.pattern.permute.xlu0 0
        %1417 = vperm.xlu0 %1416, %v1394
        %v1418 = vpop.permute.xlu0 %1417
        %1419 = vset.pattern.permute.xlu0 0
        %1420 = vperm.xlu0 %1419, %v1395
        %v1421 = vpop.permute.xlu0 %1420
        %1422 = vset.pattern.permute.xlu0 0
        %1423 = vperm.xlu0 %1422, %v1396
        %v1424 = vpop.permute.xlu0 %1423
        %1425 = vset.pattern.permute.xlu0 0
        %1426 = vperm.xlu0 %1425, %v1397
        %v1427 = vpop.permute.xlu0 %1426
        %1428 = vset.pattern.permute.xlu0 0
        %1429 = vperm.xlu0 %1428, %v1398
        %v1430 = vpop.permute.xlu0 %1429
        %v1431 = vperm.slane %v1409, %v349
        %v1432 = vperm.slane %v1412, %v349
        %v1433 = vperm.slane %v1415, %v349
        %v1434 = vperm.slane %v1418, %v349
        %v1435 = vperm.slane %v1421, %v349
        %v1436 = vperm.slane %v1424, %v349
        %v1437 = vperm.slane %v1427, %v349
        %v1438 = vperm.slane %v1430, %v349
        %v1439 = vsel %vm358, %v1432, %v1431
        %v1440 = vsel %vm360, %v1433, %v1439
        %v1441 = vsel %vm362, %v1434, %v1440
        %v1442 = vsel %vm364, %v1435, %v1441
        %v1443 = vsel %vm366, %v1436, %v1442
        %v1444 = vsel %vm368, %v1437, %v1443
        %v1445 = vsel %vm370, %v1438, %v1444
        %v1447 = vsel %vm373, %v1445, 0.0
        %1448 = vadd.xlane.f32.xlu0 %v1447
        %v1449 = vpop.xlane.xlu0 %1448
        %v1450 = vadd.f32 %v1323, %v1449
        %v1451 = vsub.f32 0.0, %v1450
        %v1452 = vmul.f32 %v1451, 1.442695
        %v1453 = vpow.pop %v1452
        %v1454 = vadd.f32 %v1453, 1.0
        %v1455 = vrcp.pop %v1454
        %v1456 = vmul.f32 %v1454, %v1455
        %v1457 = vsub.f32 1.0, %v1456
        %v1458 = vmul.f32 %v1455, %v1457
        %v1459 = vadd.f32 %v1455, %v1458
        %vm1460 = vweird.f32 %v1454
        %vm1461 = vweird.f32 %v1455
        %vm1462 = vmor %vm1460, %vm1461
        %v1463 = vsel %vm1462, %v1455, %v1459
        %v1464 = vand.u32 2147483647, %v1454
        %vm1465 = vcmp.eq.f32.partialorder %v1464, 8.507059e+37
        %v1466 = vand.u32 %v1454, 2147483648
        %v1467 = vor.u32 1.1754944e-38, %v1466
        %v1468 = vsel %vm1465, %v1467, %v1463
        %v1469 = vmul.f32 1.0, %v1468
        %v1470 = vadd.f32 %v1469, 1.0
        %v1471 = vld [vmem:[%s233] sm:$0xff]
        %v1472 = vld [vmem:[%s233 + $0x8] sm:$0xff]
        %v1473 = vmul.f32 %v1471, %v1470
        %v1474 = vmul.f32 %v1472, %v1470
        %s1475 = scalar_lea.vmem %s221, 32 [#allocation9]
        %1476 = vst [vmem:[%s1475] sm:$0xff] %v1473
        %1477 = vst [vmem:[%s1475 + $0x8] sm:$0xff] %v1474
        %s1478 = sand.u32 %s98, 1
        %s1479 = scalar_lea.sflag [#allocation4], %s1478
        %s1480 = sand.u32 %s98, 1
        %s1481 = smul.addr %s1480, 48
        %s1482 = scalar_lea.vmem [#allocation9], %s1481
        // Predicated region
        $region45: #{tpu_custom_call.1} parent=31 // pred_check
          %p1483 = pneg %p108
        $region46: #{tpu_custom_call.1} parent=31 // pred_check_branch
          %1485 = sbr.rel (%p1483) target = $region48
        $region47: #{tpu_custom_call.1} parent=31 // pred_region
          %1487 = vsyncadd %s1479, 0
          %s1488 = smul.addr %s22, 6
          %s1489 = smul.addr %s1488, 8
          %s1490 = scalar_lea.hbm %s3, %s1489
          %s1491 = sshll.u32 %s1482, 4
          %s1492 = int_to_ptr.vmem [resolvable:$true] %s1491
          %s1493 = sshll.u32 %s1490, 4
          %s1494 = int_to_ptr.hbm [resolvable:$true] %s1493
          %1499 = dma.vmem_to_hbm [thread:$0]  %s1492, 768, %s1494, %s1479, 256, 256, 16
        $region48: #{tpu_custom_call.1} parent=31 // pred_fallthru
          _
      $region32: #{tpu_custom_call.1} parent=5 // pred_fallthru
        _
      %p1500 = scmp.le.s32.totalorder 2, %s17
      // Predicated region
      $region49: #{tpu_custom_call.1} parent=5 // pred_check
        %p1501 = pneg %p1500
      $region50: #{tpu_custom_call.1} parent=5 // pred_check_branch
        %1503 = sbr.rel (%p1501) target = $region52
      $region51: #{tpu_custom_call.1} parent=5 // pred_region
        %s1504 = ssub.s32 %s17, 2
        // Predicated region
        $region53: #{tpu_custom_call.1} parent=51 // pred_check
          %p1505 = pneg %p114
        $region54: #{tpu_custom_call.1} parent=51 // pred_check_branch
          %1507 = sbr.rel (%p1505) target = $region56
        $region55: #{tpu_custom_call.1} parent=51 // pred_region
          %s1508 = sand.u32 %s99, 1
          %s1509 = scalar_lea.sflag [#allocation4], %s1508
          %s1510 = sand.u32 %s99, 1
          %s1511 = smul.addr %s1510, 48
          %s1512 = scalar_lea.vmem [#allocation9], %s1511
          %1514 = dma.done %s1509, 768
        $region56: #{tpu_custom_call.1} parent=51 // pred_fallthru
          _
      $region52: #{tpu_custom_call.1} parent=5 // pred_fallthru
        _
    $region6: #{tpu_custom_call.1} parent=1 // loop_footer
      %s21 = sadd.s32 1, %s17
    $region7: #{tpu_custom_call.1} parent=1 // loop_footer_branch
      %16 = sbr.rel target = $region3
    $region8: #{tpu_custom_call.1} parent=1 // loop_exit
      _
    %1515 = vsyncpa [#allocation3], 1
    %s1516 = scalar_lea.sflag [#allocation3], 1
    %1517 = vsyncpa %s1516, 1
    %1518 = vsyncpa [#allocation8], 1
    %s1519 = scalar_lea.sflag [#allocation8], 1
    %1520 = vsyncpa %s1519, 1
    %1521 = vsyncpa [#allocation4], 1
    %s1522 = scalar_lea.sflag [#allocation4], 1
    %1523 = vsyncpa %s1522, 1
    %1524 = vsyncpa [#allocation5], 1
    %s1525 = scalar_lea.sflag [#allocation5], 1
    %1526 = vsyncpa %s1525, 1

</llo_original>
